<compile_context>
chip_gen: v7x
topology: tpu7x:2x2x1
jax: 0.10.0
libtpu: 0.0.40
codegen_flags: <defaults>
</compile_context>

<pallas_src>
import functools

import jax
import jax.numpy as jnp
import numpy as np
from jax.experimental import pallas as pl
from jax.experimental.pallas import tpu as pltpu

_LANE = 128  # leading/trailing halo size so the data-region store is lane-aligned


def _round_up(x, m):
    return (x + m - 1) // m * m


# ----------------------------------------------------------------------------
# Fused Pallas kernel: 3 x (3x3 conv + bias + LeakyReLU(0.1)), one batch elem
# ----------------------------------------------------------------------------
def _translator_kernel(x_ref, w0_ref, b0_ref, w1_ref, b1_ref, w2_ref, b2_ref,
                       o_ref, pad_ref, *, H, W):
    # x_ref  : (1, Cin, S)      f32 channel-padded input, flat spatial (S=H*W)
    # wK_ref : (CoutK, 9*CinK)  bf16 im2col weights, K ordered (kh, kw, cin)
    # bK_ref : (CoutK, 1)       f32 bias column
    # o_ref  : (1, Cout, S)
    # pad_ref: (C_max, L)       f32 shared padded-activation scratch,
    #                           L = 128 + S + 128, data region at lanes [128, 128+S)
    S = H * W
    P = _LANE
    c_max = pad_ref.shape[0]
    L = pad_ref.shape[1]

    # Zero only the halo lanes (never overwritten by the data-region stores).
    # Both slices are 128-lane aligned -> unmasked stores.
    pad_ref[:, :P] = jnp.zeros((c_max, P), jnp.float32)
    pad_ref[:, P + S:] = jnp.zeros((c_max, L - P - S), jnp.float32)

    # Lane masks neutralizing the left/right wrap-around taps (reused by all layers).
    col = jax.lax.broadcasted_iota(jnp.int32, (1, S), 1) % W
    mask_l = col != 0          # kw == 0 taps: output column 0 reads padding
    mask_r = col != (W - 1)    # kw == 2 taps: output column W-1 reads padding

    def store_data(act):
        # Lane-aligned (offset 128, length S multiple of 128) unmasked store.
        pad_ref[:act.shape[0], P:P + S] = act

    def conv3x3_bias_lrelu(w_ref, b_ref):
        cout = w_ref.shape[0]
        cin = w_ref.shape[1] // 9
        acc = jnp.zeros((cout, S), jnp.float32)
        # K split over kh: 3 accumulating dots, only (3*cin, S) patches live at once.
        for kh in range(3):
            pieces = []
            for kw in range(3):
                start = P + (kh - 1) * W + (kw - 1)      # static slice start
                patch = pad_ref[:cin, start:start + S]   # (cin, S) f32
                if kw == 0:
                    patch = jnp.where(mask_l, patch, 0.0)
                elif kw == 2:
                    patch = jnp.where(mask_r, patch, 0.0)
                pieces.append(patch)
            patches = jnp.concatenate(pieces, axis=0).astype(jnp.bfloat16)
            w_kh = w_ref[:, kh * 3 * cin:(kh + 1) * 3 * cin]   # (cout, 3*cin) bf16
            acc = acc + jnp.dot(w_kh, patches,
                                preferred_element_type=jnp.float32)
        acc = acc + b_ref[...]
        return jnp.maximum(acc, 0.1 * acc)               # LeakyReLU(0.1)

    store_data(x_ref[0].astype(jnp.float32))
    a0 = conv3x3_bias_lrelu(w0_ref, b0_ref)
    store_data(a0)
    a1 = conv3x3_bias_lrelu(w1_ref, b1_ref)
    store_data(a1)
    a2 = conv3x3_bias_lrelu(w2_ref, b2_ref)
    o_ref[0] = a2.astype(o_ref.dtype)


def translator_forward(x_nchw, kparams):
    """kparams: [(w_flat (Cout_p, 9*Cin_p) bf16, b_col (Cout_p, 1) f32)] * 3."""
    (w0, b0), (w1, b1), (w2, b2) = kparams
    N, c_in_raw, H, W = x_nchw.shape
    S = H * W
    c_in = w0.shape[0]     # padded in_planes (conv0 is in->in)
    c_mid = w1.shape[0]    # padded planes
    c_out = w2.shape[0]    # padded planes
    assert w0.shape[1] == 9 * c_in and w1.shape[1] == 9 * c_in and w2.shape[1] == 9 * c_mid
    # Keep the matmul / output lane dim a multiple of 128 (lane-dense stores).
    assert S % _LANE == 0, "H*W must be a multiple of 128 (fold batch/rows otherwise)"

    c_max = max(c_in, c_mid, c_out)
    L = _LANE + S + _LANE

    x_flat = x_nchw.reshape(N, c_in_raw, S)   # free: NCHW is already (C, H*W)-major
    if c_in_raw < c_in:
        x_flat = jnp.pad(x_flat, ((0, 0), (0, c_in - c_in_raw), (0, 0)))

    flops = 2 * N * S * (c_in * 9 * c_in + c_mid * 9 * c_in + c_out * 9 * c_mid)
    bytes_accessed = (x_flat.size * 4 + N * c_out * S * 4
                      + (w0.size + w1.size + w2.size) * 2
                      + (b0.size + b1.size + b2.size) * 4)

    full = lambda n: (0, 0)
    out_flat = pl.pallas_call(
        functools.partial(_translator_kernel, H=H, W=W),
        out_shape=jax.ShapeDtypeStruct((N, c_out, S), x_nchw.dtype),
        grid=(N,),
        in_specs=[
            pl.BlockSpec((1, c_in, S), lambda n: (n, 0, 0)),
            pl.BlockSpec(w0.shape, full), pl.BlockSpec(b0.shape, full),
            pl.BlockSpec(w1.shape, full), pl.BlockSpec(b1.shape, full),
            pl.BlockSpec(w2.shape, full), pl.BlockSpec(b2.shape, full),
        ],
        out_specs=pl.BlockSpec((1, c_out, S), lambda n: (n, 0, 0)),
        scratch_shapes=[pltpu.VMEM((c_max, L), jnp.float32)],  # one shared scratch
        compiler_params=pltpu.CompilerParams(
            dimension_semantics=("parallel",),
            vmem_limit_bytes=32 * 1024 * 1024),
        cost_estimate=pl.CostEstimate(flops=flops, transcendentals=0,
                                      bytes_accessed=bytes_accessed),
    )(x_flat, w0, b0, w1, b1, w2, b2)
    return out_flat.reshape(N, c_out, H, W)


# ----------------------------------------------------------------------------
# Weight format conversion (host-side, done once)
# ----------------------------------------------------------------------------
def conv_to_flat_padded(w_oihw, b, cout_p, cin_p):
    # PyTorch Conv2d weight (O, I, 3, 3) -> bf16 (cout_p, 9*cin_p), K ordered (kh, kw, i);
    # channel padding with zeros so padded channels stay exactly zero.
    o, i = w_oihw.shape[0], w_oihw.shape[1]
    w = jnp.pad(w_oihw, ((0, cout_p - o), (0, cin_p - i), (0, 0), (0, 0)))
    w_flat = jnp.transpose(w, (0, 2, 3, 1)).reshape(cout_p, 9 * cin_p)
    w_flat = w_flat.astype(jnp.bfloat16)
    b_col = jnp.pad(b, (0, cout_p - o)).reshape(cout_p, 1).astype(jnp.float32)
    return w_flat, b_col


# ----------------------------------------------------------------------------
# Translator module (parameters created deterministically in-script)
# ----------------------------------------------------------------------------
class TranslatorPallas:
    def __init__(self, in_planes, planes, key):
        self.planes = planes

        def init_conv(k, cout, cin):
            kw_, kb_ = jax.random.split(k)
            fan_in = cin * 9
            bound = 1.0 / np.sqrt(fan_in)
            w = jax.random.uniform(kw_, (cout, cin, 3, 3), jnp.float32,
                                   -bound, bound)
            b = jax.random.uniform(kb_, (cout,), jnp.float32, -bound, bound)
            return w, b

        ks = jax.random.split(key, 3)
        # conv0: in->in, conv1: in->planes, conv2: planes->planes  (f32 reference copy)
        self.raw = [
            init_conv(ks[0], in_planes, in_planes),
            init_conv(ks[1], planes, in_planes),
            init_conv(ks[2], planes, planes),
        ]
        # kernel format: bf16 im2col weights with 8-aligned channel counts
        c_in_p = _round_up(in_planes, 8)
        c_mid_p = _round_up(planes, 8)
        self.kparams = [
            conv_to_flat_padded(*self.raw[0], c_in_p, c_in_p),
            conv_to_flat_padded(*self.raw[1], c_mid_p, c_in_p),
            conv_to_flat_padded(*self.raw[2], c_mid_p, c_mid_p),
        ]

    def __call__(self, x_nchw):
        out = translator_forward(x_nchw, self.kparams)
        return out[:, :self.planes]     # drop padded output channels (no-op here)


# ----------------------------------------------------------------------------
# Pure-JAX f32 reference (for validation of the Pallas kernel)
# ----------------------------------------------------------------------------
def _ref_forward(model, x_nchw):
    out = x_nchw
    for w_oihw, b in model.raw:
        out = jax.lax.conv_general_dilated(
            out, w_oihw, window_strides=(1, 1), padding=((1, 1), (1, 1)),
            dimension_numbers=("NCHW", "OIHW", "NCHW"))
        out = out + b[None, :, None, None]
        out = jnp.where(out > 0, out, 0.1 * out)
    return out


# ----------------------------------------------------------------------------
if __name__ == "__main__":
    key = jax.random.PRNGKey(0)
    k_param, k_x = jax.random.split(key)

    in_planes, planes = 4, 8
    N, H, W = 2, 16, 16

    model = TranslatorPallas(in_planes, planes, k_param)
    x = jax.random.normal(k_x, (N, in_planes, H, W), jnp.float32)

    out = jax.block_until_ready(model(x))            # (2, 8, 16, 16)
    ref = jax.block_until_ready(_ref_forward(model, x))

    # bf16 MXU operands (f32 accumulate) -> tolerance relaxed vs f32 reference.
    np.testing.assert_allclose(np.asarray(out), np.asarray(ref),
                               rtol=3e-2, atol=3e-2)
    assert out.shape == (N, planes, H, W)

    print("KERNEL_OK")
</pallas_src>

<mosaic_0001>
module attributes {stable_mosaic.version = 11 : i64} {
  func.func @_translator_kernel(%arg0: i32, %arg1: memref<1x8x256xf32, #tpu.memory_space<vmem>>, %arg2: memref<8x72xbf16, #tpu.memory_space<vmem>>, %arg3: memref<8x1xf32, #tpu.memory_space<vmem>>, %arg4: memref<8x72xbf16, #tpu.memory_space<vmem>>, %arg5: memref<8x1xf32, #tpu.memory_space<vmem>>, %arg6: memref<8x72xbf16, #tpu.memory_space<vmem>>, %arg7: memref<8x1xf32, #tpu.memory_space<vmem>>, %arg8: memref<1x8x256xf32, #tpu.memory_space<vmem>>, %arg9: memref<8x512xf32, #tpu.memory_space<vmem>>) attributes {dimension_semantics = [#tpu.dimension_semantics<parallel>], iteration_bounds = array<i64: 2>, scalar_prefetch = 0 : i64, scratch_operands = 1 : i64, tpu.core_type = #tpu.core_type<tc>, window_params = [{transform_indices = @transform_0, window_bounds = array<i64: 1, 8, 256>}, {pipeline_mode = #tpu.pipeline_mode<synchronous>, transform_indices = @transform_1, window_bounds = array<i64: 8, 72>}, {pipeline_mode = #tpu.pipeline_mode<synchronous>, transform_indices = @transform_2, window_bounds = array<i64: 8, 1>}, {pipeline_mode = #tpu.pipeline_mode<synchronous>, transform_indices = @transform_3, window_bounds = array<i64: 8, 72>}, {pipeline_mode = #tpu.pipeline_mode<synchronous>, transform_indices = @transform_4, window_bounds = array<i64: 8, 1>}, {pipeline_mode = #tpu.pipeline_mode<synchronous>, transform_indices = @transform_5, window_bounds = array<i64: 8, 72>}, {pipeline_mode = #tpu.pipeline_mode<synchronous>, transform_indices = @transform_6, window_bounds = array<i64: 8, 1>}, {transform_indices = @transform_7, window_bounds = array<i64: 1, 8, 256>}]} {
    %cst = arith.constant 0.000000e+00 : f32
    %0 = vector.broadcast %cst : f32 to vector<8x128xf32>
    %c0 = arith.constant 0 : index
    %c0_0 = arith.constant 0 : index
    %1 = vector.load %arg9[%c0, %c0_0] : memref<8x512xf32, #tpu.memory_space<vmem>>, vector<8x128xf32>
    tpu.vector_store %arg9[%c0, %c0_0], %0 {strides = array<i32>} : memref<8x512xf32, #tpu.memory_space<vmem>>, vector<8x128xf32>,
    %cst_1 = arith.constant 0.000000e+00 : f32
    %2 = vector.broadcast %cst_1 : f32 to vector<8x128xf32>
    %c0_2 = arith.constant 0 : index
    %c384 = arith.constant 384 : index
    %3 = vector.load %arg9[%c0_2, %c384] : memref<8x512xf32, #tpu.memory_space<vmem>>, vector<8x128xf32>
    tpu.vector_store %arg9[%c0_2, %c384], %2 {strides = array<i32>} : memref<8x512xf32, #tpu.memory_space<vmem>>, vector<8x128xf32>,
    %4 = tpu.iota {dimensions = array<i32: 1>} : vector<1x256xi32>
    %c16_i32 = arith.constant 16 : i32
    %c0_i32 = arith.constant 0 : i32
    %5 = arith.cmpi eq, %c16_i32, %c0_i32 : i32
    %c1_i32 = arith.constant 1 : i32
    %6 = arith.select %5, %c1_i32, %c16_i32 : i32
    %7 = vector.broadcast %6 : i32 to vector<1x256xi32>
    %8 = arith.remsi %4, %7 : vector<1x256xi32>
    %c0_i32_3 = arith.constant 0 : i32
    %9 = vector.broadcast %c0_i32_3 : i32 to vector<1x256xi32>
    %10 = arith.cmpi ne, %8, %9 : vector<1x256xi32>
    %c0_i32_4 = arith.constant 0 : i32
    %11 = vector.broadcast %c0_i32_4 : i32 to vector<1x256xi32>
    %12 = arith.cmpi slt, %8, %11 : vector<1x256xi32>
    %c0_i32_5 = arith.constant 0 : i32
    %13 = arith.cmpi slt, %6, %c0_i32_5 : i32
    %14 = vector.broadcast %13 : i1 to vector<1x256xi1>
    %15 = vector.broadcast %14 : vector<1x256xi1> to vector<1x256xi1>
    %16 = arith.xori %12, %15 : vector<1x256xi1>
    %17 = arith.andi %16, %10 : vector<1x256xi1>
    %18 = vector.broadcast %6 : i32 to vector<1x256xi32>
    %19 = arith.addi %8, %18 : vector<1x256xi32>
    %20 = arith.select %17, %19, %8 : vector<1x256xi1>, vector<1x256xi32>
    %c0_i32_6 = arith.constant 0 : i32
    %21 = vector.broadcast %c0_i32_6 : i32 to vector<1x256xi32>
    %22 = arith.cmpi ne, %20, %21 : vector<1x256xi32>
    %c15_i32 = arith.constant 15 : i32
    %23 = vector.broadcast %c15_i32 : i32 to vector<1x256xi32>
    %24 = arith.cmpi ne, %20, %23 : vector<1x256xi32>
    %c0_7 = arith.constant 0 : index
    %c0_8 = arith.constant 0 : index
    %c0_9 = arith.constant 0 : index
    %25 = vector.load %arg1[%c0_7, %c0_8, %c0_9] : memref<1x8x256xf32, #tpu.memory_space<vmem>>, vector<1x8x256xf32>
    %26 = vector.shape_cast %25 : vector<1x8x256xf32> to vector<8x256xf32>
    %c0_10 = arith.constant 0 : index
    %c128 = arith.constant 128 : index
    %27 = vector.load %arg9[%c0_10, %c128] : memref<8x512xf32, #tpu.memory_space<vmem>>, vector<8x256xf32>
    tpu.vector_store %arg9[%c0_10, %c128], %26 {strides = array<i32>} : memref<8x512xf32, #tpu.memory_space<vmem>>, vector<8x256xf32>,
    %cst_11 = arith.constant 0.000000e+00 : f32
    %28 = vector.broadcast %cst_11 : f32 to vector<8x256xf32>
    %c0_12 = arith.constant 0 : index
    %c111 = arith.constant 111 : index
    %29 = vector.load %arg9[%c0_12, %c111] : memref<8x512xf32, #tpu.memory_space<vmem>>, vector<8x256xf32>
    %cst_13 = arith.constant 0.000000e+00 : f32
    %30 = vector.shape_cast %22 : vector<1x256xi1> to vector<1x256xi1>
    %31 = vector.broadcast %30 : vector<1x256xi1> to vector<8x256xi1>
    %32 = vector.broadcast %cst_13 : f32 to vector<8x256xf32>
    %33 = arith.select %31, %29, %32 : vector<8x256xi1>, vector<8x256xf32>
    %c0_14 = arith.constant 0 : index
    %c112 = arith.constant 112 : index
    %34 = vector.load %arg9[%c0_14, %c112] : memref<8x512xf32, #tpu.memory_space<vmem>>, vector<8x256xf32>
    %c0_15 = arith.constant 0 : index
    %c113 = arith.constant 113 : index
    %35 = vector.load %arg9[%c0_15, %c113] : memref<8x512xf32, #tpu.memory_space<vmem>>, vector<8x256xf32>
    %cst_16 = arith.constant 0.000000e+00 : f32
    %36 = vector.shape_cast %24 : vector<1x256xi1> to vector<1x256xi1>
    %37 = vector.broadcast %36 : vector<1x256xi1> to vector<8x256xi1>
    %38 = vector.broadcast %cst_16 : f32 to vector<8x256xf32>
    %39 = arith.select %37, %35, %38 : vector<8x256xi1>, vector<8x256xf32>
    %40 = tpu.concatenate %33, %34, %39 in 0 : vector<8x256xf32>, vector<8x256xf32>, vector<8x256xf32> -> vector<24x256xf32>
    %41 = arith.truncf %40 : vector<24x256xf32> to vector<24x256xbf16>
    %c0_17 = arith.constant 0 : index
    %c0_18 = arith.constant 0 : index
    %42 = vector.load %arg2[%c0_17, %c0_18] : memref<8x72xbf16, #tpu.memory_space<vmem>>, vector<8x24xbf16>
    %cst_19 = arith.constant dense<0.000000e+00> : vector<8x256xf32>
    %43 = tpu.matmul %42, %41, %cst_19 {dimension_numbers = #tpu.dot_dimension_numbers<[1], [0], [0], [1], [0, 0, 1, 1], [], []>} : vector<8x24xbf16>, vector<24x256xbf16>, vector<8x256xf32> -> vector<8x256xf32>
    %44 = arith.addf %28, %43 : vector<8x256xf32>
    %c0_20 = arith.constant 0 : index
    %c127 = arith.constant 127 : index
    %45 = vector.load %arg9[%c0_20, %c127] : memref<8x512xf32, #tpu.memory_space<vmem>>, vector<8x256xf32>
    %cst_21 = arith.constant 0.000000e+00 : f32
    %46 = vector.shape_cast %22 : vector<1x256xi1> to vector<1x256xi1>
    %47 = vector.broadcast %46 : vector<1x256xi1> to vector<8x256xi1>
    %48 = vector.broadcast %cst_21 : f32 to vector<8x256xf32>
    %49 = arith.select %47, %45, %48 : vector<8x256xi1>, vector<8x256xf32>
    %c0_22 = arith.constant 0 : index
    %c128_23 = arith.constant 128 : index
    %50 = vector.load %arg9[%c0_22, %c128_23] : memref<8x512xf32, #tpu.memory_space<vmem>>, vector<8x256xf32>
    %c0_24 = arith.constant 0 : index
    %c129 = arith.constant 129 : index
    %51 = vector.load %arg9[%c0_24, %c129] : memref<8x512xf32, #tpu.memory_space<vmem>>, vector<8x256xf32>
    %cst_25 = arith.constant 0.000000e+00 : f32
    %52 = vector.shape_cast %24 : vector<1x256xi1> to vector<1x256xi1>
    %53 = vector.broadcast %52 : vector<1x256xi1> to vector<8x256xi1>
    %54 = vector.broadcast %cst_25 : f32 to vector<8x256xf32>
    %55 = arith.select %53, %51, %54 : vector<8x256xi1>, vector<8x256xf32>
    %56 = tpu.concatenate %49, %50, %55 in 0 : vector<8x256xf32>, vector<8x256xf32>, vector<8x256xf32> -> vector<24x256xf32>
    %57 = arith.truncf %56 : vector<24x256xf32> to vector<24x256xbf16>
    %c0_26 = arith.constant 0 : index
    %c24 = arith.constant 24 : index
    %58 = vector.load %arg2[%c0_26, %c24] : memref<8x72xbf16, #tpu.memory_space<vmem>>, vector<8x24xbf16>
    %cst_27 = arith.constant dense<0.000000e+00> : vector<8x256xf32>
    %59 = tpu.matmul %58, %57, %cst_27 {dimension_numbers = #tpu.dot_dimension_numbers<[1], [0], [0], [1], [0, 0, 1, 1], [], []>} : vector<8x24xbf16>, vector<24x256xbf16>, vector<8x256xf32> -> vector<8x256xf32>
    %60 = arith.addf %44, %59 : vector<8x256xf32>
    %c0_28 = arith.constant 0 : index
    %c143 = arith.constant 143 : index
    %61 = vector.load %arg9[%c0_28, %c143] : memref<8x512xf32, #tpu.memory_space<vmem>>, vector<8x256xf32>
    %cst_29 = arith.constant 0.000000e+00 : f32
    %62 = vector.shape_cast %22 : vector<1x256xi1> to vector<1x256xi1>
    %63 = vector.broadcast %62 : vector<1x256xi1> to vector<8x256xi1>
    %64 = vector.broadcast %cst_29 : f32 to vector<8x256xf32>
    %65 = arith.select %63, %61, %64 : vector<8x256xi1>, vector<8x256xf32>
    %c0_30 = arith.constant 0 : index
    %c144 = arith.constant 144 : index
    %66 = vector.load %arg9[%c0_30, %c144] : memref<8x512xf32, #tpu.memory_space<vmem>>, vector<8x256xf32>
    %c0_31 = arith.constant 0 : index
    %c145 = arith.constant 145 : index
    %67 = vector.load %arg9[%c0_31, %c145] : memref<8x512xf32, #tpu.memory_space<vmem>>, vector<8x256xf32>
    %cst_32 = arith.constant 0.000000e+00 : f32
    %68 = vector.shape_cast %24 : vector<1x256xi1> to vector<1x256xi1>
    %69 = vector.broadcast %68 : vector<1x256xi1> to vector<8x256xi1>
    %70 = vector.broadcast %cst_32 : f32 to vector<8x256xf32>
    %71 = arith.select %69, %67, %70 : vector<8x256xi1>, vector<8x256xf32>
    %72 = tpu.concatenate %65, %66, %71 in 0 : vector<8x256xf32>, vector<8x256xf32>, vector<8x256xf32> -> vector<24x256xf32>
    %73 = arith.truncf %72 : vector<24x256xf32> to vector<24x256xbf16>
    %c0_33 = arith.constant 0 : index
    %c48 = arith.constant 48 : index
    %74 = vector.load %arg2[%c0_33, %c48] : memref<8x72xbf16, #tpu.memory_space<vmem>>, vector<8x24xbf16>
    %cst_34 = arith.constant dense<0.000000e+00> : vector<8x256xf32>
    %75 = tpu.matmul %74, %73, %cst_34 {dimension_numbers = #tpu.dot_dimension_numbers<[1], [0], [0], [1], [0, 0, 1, 1], [], []>} : vector<8x24xbf16>, vector<24x256xbf16>, vector<8x256xf32> -> vector<8x256xf32>
    %76 = arith.addf %60, %75 : vector<8x256xf32>
    %c0_35 = arith.constant 0 : index
    %c0_36 = arith.constant 0 : index
    %77 = vector.load %arg3[%c0_35, %c0_36] : memref<8x1xf32, #tpu.memory_space<vmem>>, vector<8x1xf32>
    %78 = vector.broadcast %77 : vector<8x1xf32> to vector<8x256xf32>
    %79 = arith.addf %76, %78 : vector<8x256xf32>
    %cst_37 = arith.constant 1.000000e-01 : f32
    %80 = vector.broadcast %cst_37 : f32 to vector<8x256xf32>
    %81 = arith.mulf %80, %79 : vector<8x256xf32>
    %82 = arith.maximumf %79, %81 : vector<8x256xf32>
    %c0_38 = arith.constant 0 : index
    %c128_39 = arith.constant 128 : index
    %83 = vector.load %arg9[%c0_38, %c128_39] : memref<8x512xf32, #tpu.memory_space<vmem>>, vector<8x256xf32>
    tpu.vector_store %arg9[%c0_38, %c128_39], %82 {strides = array<i32>} : memref<8x512xf32, #tpu.memory_space<vmem>>, vector<8x256xf32>,
    %cst_40 = arith.constant 0.000000e+00 : f32
    %84 = vector.broadcast %cst_40 : f32 to vector<8x256xf32>
    %c0_41 = arith.constant 0 : index
    %c111_42 = arith.constant 111 : index
    %85 = vector.load %arg9[%c0_41, %c111_42] : memref<8x512xf32, #tpu.memory_space<vmem>>, vector<8x256xf32>
    %cst_43 = arith.constant 0.000000e+00 : f32
    %86 = vector.shape_cast %22 : vector<1x256xi1> to vector<1x256xi1>
    %87 = vector.broadcast %86 : vector<1x256xi1> to vector<8x256xi1>
    %88 = vector.broadcast %cst_43 : f32 to vector<8x256xf32>
    %89 = arith.select %87, %85, %88 : vector<8x256xi1>, vector<8x256xf32>
    %c0_44 = arith.constant 0 : index
    %c112_45 = arith.constant 112 : index
    %90 = vector.load %arg9[%c0_44, %c112_45] : memref<8x512xf32, #tpu.memory_space<vmem>>, vector<8x256xf32>
    %c0_46 = arith.constant 0 : index
    %c113_47 = arith.constant 113 : index
    %91 = vector.load %arg9[%c0_46, %c113_47] : memref<8x512xf32, #tpu.memory_space<vmem>>, vector<8x256xf32>
    %cst_48 = arith.constant 0.000000e+00 : f32
    %92 = vector.shape_cast %24 : vector<1x256xi1> to vector<1x256xi1>
    %93 = vector.broadcast %92 : vector<1x256xi1> to vector<8x256xi1>
    %94 = vector.broadcast %cst_48 : f32 to vector<8x256xf32>
    %95 = arith.select %93, %91, %94 : vector<8x256xi1>, vector<8x256xf32>
    %96 = tpu.concatenate %89, %90, %95 in 0 : vector<8x256xf32>, vector<8x256xf32>, vector<8x256xf32> -> vector<24x256xf32>
    %97 = arith.truncf %96 : vector<24x256xf32> to vector<24x256xbf16>
    %c0_49 = arith.constant 0 : index
    %c0_50 = arith.constant 0 : index
    %98 = vector.load %arg4[%c0_49, %c0_50] : memref<8x72xbf16, #tpu.memory_space<vmem>>, vector<8x24xbf16>
    %cst_51 = arith.constant dense<0.000000e+00> : vector<8x256xf32>
    %99 = tpu.matmul %98, %97, %cst_51 {dimension_numbers = #tpu.dot_dimension_numbers<[1], [0], [0], [1], [0, 0, 1, 1], [], []>} : vector<8x24xbf16>, vector<24x256xbf16>, vector<8x256xf32> -> vector<8x256xf32>
    %100 = arith.addf %84, %99 : vector<8x256xf32>
    %c0_52 = arith.constant 0 : index
    %c127_53 = arith.constant 127 : index
    %101 = vector.load %arg9[%c0_52, %c127_53] : memref<8x512xf32, #tpu.memory_space<vmem>>, vector<8x256xf32>
    %cst_54 = arith.constant 0.000000e+00 : f32
    %102 = vector.shape_cast %22 : vector<1x256xi1> to vector<1x256xi1>
    %103 = vector.broadcast %102 : vector<1x256xi1> to vector<8x256xi1>
    %104 = vector.broadcast %cst_54 : f32 to vector<8x256xf32>
    %105 = arith.select %103, %101, %104 : vector<8x256xi1>, vector<8x256xf32>
    %c0_55 = arith.constant 0 : index
    %c128_56 = arith.constant 128 : index
    %106 = vector.load %arg9[%c0_55, %c128_56] : memref<8x512xf32, #tpu.memory_space<vmem>>, vector<8x256xf32>
    %c0_57 = arith.constant 0 : index
    %c129_58 = arith.constant 129 : index
    %107 = vector.load %arg9[%c0_57, %c129_58] : memref<8x512xf32, #tpu.memory_space<vmem>>, vector<8x256xf32>
    %cst_59 = arith.constant 0.000000e+00 : f32
    %108 = vector.shape_cast %24 : vector<1x256xi1> to vector<1x256xi1>
    %109 = vector.broadcast %108 : vector<1x256xi1> to vector<8x256xi1>
    %110 = vector.broadcast %cst_59 : f32 to vector<8x256xf32>
    %111 = arith.select %109, %107, %110 : vector<8x256xi1>, vector<8x256xf32>
    %112 = tpu.concatenate %105, %106, %111 in 0 : vector<8x256xf32>, vector<8x256xf32>, vector<8x256xf32> -> vector<24x256xf32>
    %113 = arith.truncf %112 : vector<24x256xf32> to vector<24x256xbf16>
    %c0_60 = arith.constant 0 : index
    %c24_61 = arith.constant 24 : index
    %114 = vector.load %arg4[%c0_60, %c24_61] : memref<8x72xbf16, #tpu.memory_space<vmem>>, vector<8x24xbf16>
    %cst_62 = arith.constant dense<0.000000e+00> : vector<8x256xf32>
    %115 = tpu.matmul %114, %113, %cst_62 {dimension_numbers = #tpu.dot_dimension_numbers<[1], [0], [0], [1], [0, 0, 1, 1], [], []>} : vector<8x24xbf16>, vector<24x256xbf16>, vector<8x256xf32> -> vector<8x256xf32>
    %116 = arith.addf %100, %115 : vector<8x256xf32>
    %c0_63 = arith.constant 0 : index
    %c143_64 = arith.constant 143 : index
    %117 = vector.load %arg9[%c0_63, %c143_64] : memref<8x512xf32, #tpu.memory_space<vmem>>, vector<8x256xf32>
    %cst_65 = arith.constant 0.000000e+00 : f32
    %118 = vector.shape_cast %22 : vector<1x256xi1> to vector<1x256xi1>
    %119 = vector.broadcast %118 : vector<1x256xi1> to vector<8x256xi1>
    %120 = vector.broadcast %cst_65 : f32 to vector<8x256xf32>
    %121 = arith.select %119, %117, %120 : vector<8x256xi1>, vector<8x256xf32>
    %c0_66 = arith.constant 0 : index
    %c144_67 = arith.constant 144 : index
    %122 = vector.load %arg9[%c0_66, %c144_67] : memref<8x512xf32, #tpu.memory_space<vmem>>, vector<8x256xf32>
    %c0_68 = arith.constant 0 : index
    %c145_69 = arith.constant 145 : index
    %123 = vector.load %arg9[%c0_68, %c145_69] : memref<8x512xf32, #tpu.memory_space<vmem>>, vector<8x256xf32>
    %cst_70 = arith.constant 0.000000e+00 : f32
    %124 = vector.shape_cast %24 : vector<1x256xi1> to vector<1x256xi1>
    %125 = vector.broadcast %124 : vector<1x256xi1> to vector<8x256xi1>
    %126 = vector.broadcast %cst_70 : f32 to vector<8x256xf32>
    %127 = arith.select %125, %123, %126 : vector<8x256xi1>, vector<8x256xf32>
    %128 = tpu.concatenate %121, %122, %127 in 0 : vector<8x256xf32>, vector<8x256xf32>, vector<8x256xf32> -> vector<24x256xf32>
    %129 = arith.truncf %128 : vector<24x256xf32> to vector<24x256xbf16>
    %c0_71 = arith.constant 0 : index
    %c48_72 = arith.constant 48 : index
    %130 = vector.load %arg4[%c0_71, %c48_72] : memref<8x72xbf16, #tpu.memory_space<vmem>>, vector<8x24xbf16>
    %cst_73 = arith.constant dense<0.000000e+00> : vector<8x256xf32>
    %131 = tpu.matmul %130, %129, %cst_73 {dimension_numbers = #tpu.dot_dimension_numbers<[1], [0], [0], [1], [0, 0, 1, 1], [], []>} : vector<8x24xbf16>, vector<24x256xbf16>, vector<8x256xf32> -> vector<8x256xf32>
    %132 = arith.addf %116, %131 : vector<8x256xf32>
    %c0_74 = arith.constant 0 : index
    %c0_75 = arith.constant 0 : index
    %133 = vector.load %arg5[%c0_74, %c0_75] : memref<8x1xf32, #tpu.memory_space<vmem>>, vector<8x1xf32>
    %134 = vector.broadcast %133 : vector<8x1xf32> to vector<8x256xf32>
    %135 = arith.addf %132, %134 : vector<8x256xf32>
    %cst_76 = arith.constant 1.000000e-01 : f32
    %136 = vector.broadcast %cst_76 : f32 to vector<8x256xf32>
    %137 = arith.mulf %136, %135 : vector<8x256xf32>
    %138 = arith.maximumf %135, %137 : vector<8x256xf32>
    %c0_77 = arith.constant 0 : index
    %c128_78 = arith.constant 128 : index
    %139 = vector.load %arg9[%c0_77, %c128_78] : memref<8x512xf32, #tpu.memory_space<vmem>>, vector<8x256xf32>
    tpu.vector_store %arg9[%c0_77, %c128_78], %138 {strides = array<i32>} : memref<8x512xf32, #tpu.memory_space<vmem>>, vector<8x256xf32>,
    %cst_79 = arith.constant 0.000000e+00 : f32
    %140 = vector.broadcast %cst_79 : f32 to vector<8x256xf32>
    %c0_80 = arith.constant 0 : index
    %c111_81 = arith.constant 111 : index
    %141 = vector.load %arg9[%c0_80, %c111_81] : memref<8x512xf32, #tpu.memory_space<vmem>>, vector<8x256xf32>
    %cst_82 = arith.constant 0.000000e+00 : f32
    %142 = vector.shape_cast %22 : vector<1x256xi1> to vector<1x256xi1>
    %143 = vector.broadcast %142 : vector<1x256xi1> to vector<8x256xi1>
    %144 = vector.broadcast %cst_82 : f32 to vector<8x256xf32>
    %145 = arith.select %143, %141, %144 : vector<8x256xi1>, vector<8x256xf32>
    %c0_83 = arith.constant 0 : index
    %c112_84 = arith.constant 112 : index
    %146 = vector.load %arg9[%c0_83, %c112_84] : memref<8x512xf32, #tpu.memory_space<vmem>>, vector<8x256xf32>
    %c0_85 = arith.constant 0 : index
    %c113_86 = arith.constant 113 : index
    %147 = vector.load %arg9[%c0_85, %c113_86] : memref<8x512xf32, #tpu.memory_space<vmem>>, vector<8x256xf32>
    %cst_87 = arith.constant 0.000000e+00 : f32
    %148 = vector.shape_cast %24 : vector<1x256xi1> to vector<1x256xi1>
    %149 = vector.broadcast %148 : vector<1x256xi1> to vector<8x256xi1>
    %150 = vector.broadcast %cst_87 : f32 to vector<8x256xf32>
    %151 = arith.select %149, %147, %150 : vector<8x256xi1>, vector<8x256xf32>
    %152 = tpu.concatenate %145, %146, %151 in 0 : vector<8x256xf32>, vector<8x256xf32>, vector<8x256xf32> -> vector<24x256xf32>
    %153 = arith.truncf %152 : vector<24x256xf32> to vector<24x256xbf16>
    %c0_88 = arith.constant 0 : index
    %c0_89 = arith.constant 0 : index
    %154 = vector.load %arg6[%c0_88, %c0_89] : memref<8x72xbf16, #tpu.memory_space<vmem>>, vector<8x24xbf16>
    %cst_90 = arith.constant dense<0.000000e+00> : vector<8x256xf32>
    %155 = tpu.matmul %154, %153, %cst_90 {dimension_numbers = #tpu.dot_dimension_numbers<[1], [0], [0], [1], [0, 0, 1, 1], [], []>} : vector<8x24xbf16>, vector<24x256xbf16>, vector<8x256xf32> -> vector<8x256xf32>
    %156 = arith.addf %140, %155 : vector<8x256xf32>
    %c0_91 = arith.constant 0 : index
    %c127_92 = arith.constant 127 : index
    %157 = vector.load %arg9[%c0_91, %c127_92] : memref<8x512xf32, #tpu.memory_space<vmem>>, vector<8x256xf32>
    %cst_93 = arith.constant 0.000000e+00 : f32
    %158 = vector.shape_cast %22 : vector<1x256xi1> to vector<1x256xi1>
    %159 = vector.broadcast %158 : vector<1x256xi1> to vector<8x256xi1>
    %160 = vector.broadcast %cst_93 : f32 to vector<8x256xf32>
    %161 = arith.select %159, %157, %160 : vector<8x256xi1>, vector<8x256xf32>
    %c0_94 = arith.constant 0 : index
    %c128_95 = arith.constant 128 : index
    %162 = vector.load %arg9[%c0_94, %c128_95] : memref<8x512xf32, #tpu.memory_space<vmem>>, vector<8x256xf32>
    %c0_96 = arith.constant 0 : index
    %c129_97 = arith.constant 129 : index
    %163 = vector.load %arg9[%c0_96, %c129_97] : memref<8x512xf32, #tpu.memory_space<vmem>>, vector<8x256xf32>
    %cst_98 = arith.constant 0.000000e+00 : f32
    %164 = vector.shape_cast %24 : vector<1x256xi1> to vector<1x256xi1>
    %165 = vector.broadcast %164 : vector<1x256xi1> to vector<8x256xi1>
    %166 = vector.broadcast %cst_98 : f32 to vector<8x256xf32>
    %167 = arith.select %165, %163, %166 : vector<8x256xi1>, vector<8x256xf32>
    %168 = tpu.concatenate %161, %162, %167 in 0 : vector<8x256xf32>, vector<8x256xf32>, vector<8x256xf32> -> vector<24x256xf32>
    %169 = arith.truncf %168 : vector<24x256xf32> to vector<24x256xbf16>
    %c0_99 = arith.constant 0 : index
    %c24_100 = arith.constant 24 : index
    %170 = vector.load %arg6[%c0_99, %c24_100] : memref<8x72xbf16, #tpu.memory_space<vmem>>, vector<8x24xbf16>
    %cst_101 = arith.constant dense<0.000000e+00> : vector<8x256xf32>
    %171 = tpu.matmul %170, %169, %cst_101 {dimension_numbers = #tpu.dot_dimension_numbers<[1], [0], [0], [1], [0, 0, 1, 1], [], []>} : vector<8x24xbf16>, vector<24x256xbf16>, vector<8x256xf32> -> vector<8x256xf32>
    %172 = arith.addf %156, %171 : vector<8x256xf32>
    %c0_102 = arith.constant 0 : index
    %c143_103 = arith.constant 143 : index
    %173 = vector.load %arg9[%c0_102, %c143_103] : memref<8x512xf32, #tpu.memory_space<vmem>>, vector<8x256xf32>
    %cst_104 = arith.constant 0.000000e+00 : f32
    %174 = vector.shape_cast %22 : vector<1x256xi1> to vector<1x256xi1>
    %175 = vector.broadcast %174 : vector<1x256xi1> to vector<8x256xi1>
    %176 = vector.broadcast %cst_104 : f32 to vector<8x256xf32>
    %177 = arith.select %175, %173, %176 : vector<8x256xi1>, vector<8x256xf32>
    %c0_105 = arith.constant 0 : index
    %c144_106 = arith.constant 144 : index
    %178 = vector.load %arg9[%c0_105, %c144_106] : memref<8x512xf32, #tpu.memory_space<vmem>>, vector<8x256xf32>
    %c0_107 = arith.constant 0 : index
    %c145_108 = arith.constant 145 : index
    %179 = vector.load %arg9[%c0_107, %c145_108] : memref<8x512xf32, #tpu.memory_space<vmem>>, vector<8x256xf32>
    %cst_109 = arith.constant 0.000000e+00 : f32
    %180 = vector.shape_cast %24 : vector<1x256xi1> to vector<1x256xi1>
    %181 = vector.broadcast %180 : vector<1x256xi1> to vector<8x256xi1>
    %182 = vector.broadcast %cst_109 : f32 to vector<8x256xf32>
    %183 = arith.select %181, %179, %182 : vector<8x256xi1>, vector<8x256xf32>
    %184 = tpu.concatenate %177, %178, %183 in 0 : vector<8x256xf32>, vector<8x256xf32>, vector<8x256xf32> -> vector<24x256xf32>
    %185 = arith.truncf %184 : vector<24x256xf32> to vector<24x256xbf16>
    %c0_110 = arith.constant 0 : index
    %c48_111 = arith.constant 48 : index
    %186 = vector.load %arg6[%c0_110, %c48_111] : memref<8x72xbf16, #tpu.memory_space<vmem>>, vector<8x24xbf16>
    %cst_112 = arith.constant dense<0.000000e+00> : vector<8x256xf32>
    %187 = tpu.matmul %186, %185, %cst_112 {dimension_numbers = #tpu.dot_dimension_numbers<[1], [0], [0], [1], [0, 0, 1, 1], [], []>} : vector<8x24xbf16>, vector<24x256xbf16>, vector<8x256xf32> -> vector<8x256xf32>
    %188 = arith.addf %172, %187 : vector<8x256xf32>
    %c0_113 = arith.constant 0 : index
    %c0_114 = arith.constant 0 : index
    %189 = vector.load %arg7[%c0_113, %c0_114] : memref<8x1xf32, #tpu.memory_space<vmem>>, vector<8x1xf32>
    %190 = vector.broadcast %189 : vector<8x1xf32> to vector<8x256xf32>
    %191 = arith.addf %188, %190 : vector<8x256xf32>
    %cst_115 = arith.constant 1.000000e-01 : f32
    %192 = vector.broadcast %cst_115 : f32 to vector<8x256xf32>
    %193 = arith.mulf %192, %191 : vector<8x256xf32>
    %194 = arith.maximumf %191, %193 : vector<8x256xf32>
    %c0_116 = arith.constant 0 : index
    %c0_117 = arith.constant 0 : index
    %c0_118 = arith.constant 0 : index
    %195 = vector.load %arg8[%c0_116, %c0_117, %c0_118] : memref<1x8x256xf32, #tpu.memory_space<vmem>>, vector<1x8x256xf32>
    %196 = vector.shape_cast %195 : vector<1x8x256xf32> to vector<8x256xf32>
    %197 = vector.shape_cast %194 : vector<8x256xf32> to vector<1x8x256xf32>
    tpu.vector_store %arg8[%c0_116, %c0_117, %c0_118], %197 {strides = array<i32>} : memref<1x8x256xf32, #tpu.memory_space<vmem>>, vector<1x8x256xf32>,
    return
  }
  func.func @transform_0(%arg0: i32) -> (i32, i32, i32) {
    %c0_i32 = arith.constant 0 : i32
    %c0_i32_0 = arith.constant 0 : i32
    %c0_i32_1 = arith.constant 0 : i32
    return %arg0, %c0_i32, %c0_i32_0 : i32, i32, i32
  }
  func.func @transform_1(%arg0: i32) -> (i32, i32) {
    %c0_i32 = arith.constant 0 : i32
    %c0_i32_0 = arith.constant 0 : i32
    %c0_i32_1 = arith.constant 0 : i32
    return %c0_i32, %c0_i32_0 : i32, i32
  }
  func.func @transform_2(%arg0: i32) -> (i32, i32) {
    %c0_i32 = arith.constant 0 : i32
    %c0_i32_0 = arith.constant 0 : i32
    %c0_i32_1 = arith.constant 0 : i32
    return %c0_i32, %c0_i32_0 : i32, i32
  }
  func.func @transform_3(%arg0: i32) -> (i32, i32) {
    %c0_i32 = arith.constant 0 : i32
    %c0_i32_0 = arith.constant 0 : i32
    %c0_i32_1 = arith.constant 0 : i32
    return %c0_i32, %c0_i32_0 : i32, i32
  }
  func.func @transform_4(%arg0: i32) -> (i32, i32) {
    %c0_i32 = arith.constant 0 : i32
    %c0_i32_0 = arith.constant 0 : i32
    %c0_i32_1 = arith.constant 0 : i32
    return %c0_i32, %c0_i32_0 : i32, i32
  }
  func.func @transform_5(%arg0: i32) -> (i32, i32) {
    %c0_i32 = arith.constant 0 : i32
    %c0_i32_0 = arith.constant 0 : i32
    %c0_i32_1 = arith.constant 0 : i32
    return %c0_i32, %c0_i32_0 : i32, i32
  }
  func.func @transform_6(%arg0: i32) -> (i32, i32) {
    %c0_i32 = arith.constant 0 : i32
    %c0_i32_0 = arith.constant 0 : i32
    %c0_i32_1 = arith.constant 0 : i32
    return %c0_i32, %c0_i32_0 : i32, i32
  }
  func.func @transform_7(%arg0: i32) -> (i32, i32, i32) {
    %c0_i32 = arith.constant 0 : i32
    %c0_i32_0 = arith.constant 0 : i32
    %c0_i32_1 = arith.constant 0 : i32
    return %arg0, %c0_i32, %c0_i32_0 : i32, i32, i32
  }
}

</mosaic_0001>

<llo_original>
// kernel: tpu_custom_call.1
$region0: #{tpu_custom_call.1}
  #allocation0 [shape = 'u32[]', space=smem, size = 0x4, offset = 0x4, fixed_abs, tag = 'smem constant byte address 0x4 - core index']
  #allocation1 [shape = 'u32[144,128]{1,0:T(1,128)}', space=vmem, size = 0x12000, scoped, tag = 'internal scratch']
  #allocation2 [shape = 'f32[8,512]{1,0:T(8,128)}', space=vmem, size = 0x4000, scoped, tag = 'scratch operand']
  %s0 = inlined_call_operand.hbm [shape: f32[2,8,256], index: 0, kind: input, shape index: {}]
  %s1 = inlined_call_operand.vmem [shape: bf16[8,72], index: 1, kind: input, shape index: {}]
  %s2 = inlined_call_operand.vmem [shape: f32[8,1], index: 2, kind: input, shape index: {}]
  %s3 = inlined_call_operand.vmem [shape: bf16[8,72], index: 3, kind: input, shape index: {}]
  %s4 = inlined_call_operand.vmem [shape: f32[8,1], index: 4, kind: input, shape index: {}]
  %s5 = inlined_call_operand.vmem [shape: bf16[8,72], index: 5, kind: input, shape index: {}]
  %s6 = inlined_call_operand.vmem [shape: f32[8,1], index: 6, kind: input, shape index: {}]
  %s7 = inlined_call_operand.hbm [shape: f32[2,8,256], index: 7, kind: output, shape index: {}]
  %s8 = sld [smem:[#allocation0]]
  $region65: #{tpu_custom_call.1} parent=0
    _
  %s10 = ssub.s32 1, %s8
  %s11 = scalar_select 0, %s10, %s8
  $region1: #{tpu_custom_call.1} parent=0
    #allocation3 [shape = 'u8[16384]{0}', space=vmem, size = 0x4000, scoped, tag = 'input window, operand 0']
    #allocation4 [shape = 's32[2]{0}', space=sflag, size = 0x8, scoped, tag = 'scoped memory for tpu_custom_call.1']
    #allocation5 [shape = 's32[2]{0}', space=sflag, size = 0x8, scoped, tag = 'scoped memory for tpu_custom_call.1']
    #allocation6 [shape = 'u8[16384]{0}', space=vmem, size = 0x4000, scoped, tag = 'output window, operand 0']
    %12 = vsyncpa [#allocation4], 0
    %s13 = scalar_lea.sflag [#allocation4], 1
    %14 = vsyncpa %s13, 0
    %15 = vsyncpa [#allocation5], 0
    %s16 = scalar_lea.sflag [#allocation5], 1
    %17 = vsyncpa %s16, 0
    loop: start=0, step=1, limit=4
    $region2: #{tpu_custom_call.1} parent=1 // loop_pre_header
      _
    $region3: #{tpu_custom_call.1} parent=1 // loop_header
      %s19 = sphi 0, %s23
      %p20 = scmp.ge.s32.totalorder %s19, 4
      %s29 = sphi 0, %s31
      %s32 = sphi 0, %s29
      %s33 = sphi 0, %s32
      %s49 = sphi 0, %s33
      %s53 = sphi 0, %s53
      %s55 = sphi 0, %s53
      %s56 = sphi 0, %s55
      %s70 = sphi 0, %s56
      %s74 = sphi 0, %s74
      %s76 = sphi 0, %s74
      %s77 = sphi 0, %s76
      %s91 = sphi 0, %s77
      %s95 = sphi 0, %s95
      %s97 = sphi 0, %s95
      %s98 = sphi 0, %s97
      %s112 = sphi 0, %s98
      %s116 = sphi 0, %s116
      %s118 = sphi 0, %s116
      %s119 = sphi 0, %s118
      %s133 = sphi 0, %s119
      %s137 = sphi 0, %s137
      %s139 = sphi 0, %s137
      %s140 = sphi 0, %s139
      %s154 = sphi 0, %s140
      %s158 = sphi 0, %s158
      %s160 = sphi 0, %s158
      %s161 = sphi 0, %s160
      %s175 = sphi 0, %s161
      %s181 = sphi 0, %s183
      %s184 = sphi 0, %s181
      %s185 = sphi 0, %s184
      %s201 = sphi 0, %s185
    $region4: #{tpu_custom_call.1} parent=1 // loop_header_branch
      %22 = sbr.rel (%p20) target = $region8
    $region5: #{tpu_custom_call.1} parent=1 // loop_body
      %s24 = ssub.s32 %s19, 1
      %s25 = ssub.s32 %s19, 2
      %s26 = sadd.s32 %s19, 1
      %s27 = ssub.s32 %s19, %s26
      %p28 = scmp.eq.s32.totalorder %s27, 0
      %s30 = sadd.s32 %s29, 1
      %s31 = scalar_select %p28, %s29, %s30
      %p34 = pneg %p28
      %p35 = scmp.eq.s32.totalorder %s19, 1
      %p36 = por %p34, %p35
      %p37 = scmp.ne.s32.totalorder %s29, %s32
      %p38 = scmp.eq.s32.totalorder %s19, 0
      %p39 = por %p37, %p38
      %p40 = scmp.ne.s32.totalorder %s29, %s32
      %p41 = scmp.eq.s32.totalorder %s24, 1
      %p42 = por %p40, %p41
      %p43 = scmp.ne.s32.totalorder %s32, %s33
      %p44 = scmp.eq.s32.totalorder %s24, 0
      %p45 = por %p43, %p44
      %p46 = scmp.ne.s32.totalorder %s32, %s33
      %p47 = scmp.eq.s32.totalorder %s25, 1
      %p48 = por %p46, %p47
      %p50 = scmp.ne.s32.totalorder %s33, %s49
      %p51 = scmp.eq.s32.totalorder %s25, 0
      %p52 = por %p50, %p51
      %s54 = sadd.s32 %s53, 1
      %p57 = scmp.eq.s32.totalorder %s19, 1
      %p58 = scmp.ne.s32.totalorder %s53, %s55
      %p59 = scmp.eq.s32.totalorder %s19, 0
      %p60 = por %p58, %p59
      %p61 = scmp.ne.s32.totalorder %s53, %s55
      %p62 = scmp.eq.s32.totalorder %s24, 1
      %p63 = por %p61, %p62
      %p64 = scmp.ne.s32.totalorder %s55, %s56
      %p65 = scmp.eq.s32.totalorder %s24, 0
      %p66 = por %p64, %p65
      %p67 = scmp.ne.s32.totalorder %s55, %s56
      %p68 = scmp.eq.s32.totalorder %s25, 1
      %p69 = por %p67, %p68
      %p71 = scmp.ne.s32.totalorder %s56, %s70
      %p72 = scmp.eq.s32.totalorder %s25, 0
      %p73 = por %p71, %p72
      %s75 = sadd.s32 %s74, 1
      %p78 = scmp.eq.s32.totalorder %s19, 1
      %p79 = scmp.ne.s32.totalorder %s74, %s76
      %p80 = scmp.eq.s32.totalorder %s19, 0
      %p81 = por %p79, %p80
      %p82 = scmp.ne.s32.totalorder %s74, %s76
      %p83 = scmp.eq.s32.totalorder %s24, 1
      %p84 = por %p82, %p83
      %p85 = scmp.ne.s32.totalorder %s76, %s77
      %p86 = scmp.eq.s32.totalorder %s24, 0
      %p87 = por %p85, %p86
      %p88 = scmp.ne.s32.totalorder %s76, %s77
      %p89 = scmp.eq.s32.totalorder %s25, 1
      %p90 = por %p88, %p89
      %p92 = scmp.ne.s32.totalorder %s77, %s91
      %p93 = scmp.eq.s32.totalorder %s25, 0
      %p94 = por %p92, %p93
      %s96 = sadd.s32 %s95, 1
      %p99 = scmp.eq.s32.totalorder %s19, 1
      %p100 = scmp.ne.s32.totalorder %s95, %s97
      %p101 = scmp.eq.s32.totalorder %s19, 0
      %p102 = por %p100, %p101
      %p103 = scmp.ne.s32.totalorder %s95, %s97
      %p104 = scmp.eq.s32.totalorder %s24, 1
      %p105 = por %p103, %p104
      %p106 = scmp.ne.s32.totalorder %s97, %s98
      %p107 = scmp.eq.s32.totalorder %s24, 0
      %p108 = por %p106, %p107
      %p109 = scmp.ne.s32.totalorder %s97, %s98
      %p110 = scmp.eq.s32.totalorder %s25, 1
      %p111 = por %p109, %p110
      %p113 = scmp.ne.s32.totalorder %s98, %s112
      %p114 = scmp.eq.s32.totalorder %s25, 0
      %p115 = por %p113, %p114
      %s117 = sadd.s32 %s116, 1
      %p120 = scmp.eq.s32.totalorder %s19, 1
      %p121 = scmp.ne.s32.totalorder %s116, %s118
      %p122 = scmp.eq.s32.totalorder %s19, 0
      %p123 = por %p121, %p122
      %p124 = scmp.ne.s32.totalorder %s116, %s118
      %p125 = scmp.eq.s32.totalorder %s24, 1
      %p126 = por %p124, %p125
      %p127 = scmp.ne.s32.totalorder %s118, %s119
      %p128 = scmp.eq.s32.totalorder %s24, 0
      %p129 = por %p127, %p128
      %p130 = scmp.ne.s32.totalorder %s118, %s119
      %p131 = scmp.eq.s32.totalorder %s25, 1
      %p132 = por %p130, %p131
      %p134 = scmp.ne.s32.totalorder %s119, %s133
      %p135 = scmp.eq.s32.totalorder %s25, 0
      %p136 = por %p134, %p135
      %s138 = sadd.s32 %s137, 1
      %p141 = scmp.eq.s32.totalorder %s19, 1
      %p142 = scmp.ne.s32.totalorder %s137, %s139
      %p143 = scmp.eq.s32.totalorder %s19, 0
      %p144 = por %p142, %p143
      %p145 = scmp.ne.s32.totalorder %s137, %s139
      %p146 = scmp.eq.s32.totalorder %s24, 1
      %p147 = por %p145, %p146
      %p148 = scmp.ne.s32.totalorder %s139, %s140
      %p149 = scmp.eq.s32.totalorder %s24, 0
      %p150 = por %p148, %p149
      %p151 = scmp.ne.s32.totalorder %s139, %s140
      %p152 = scmp.eq.s32.totalorder %s25, 1
      %p153 = por %p151, %p152
      %p155 = scmp.ne.s32.totalorder %s140, %s154
      %p156 = scmp.eq.s32.totalorder %s25, 0
      %p157 = por %p155, %p156
      %s159 = sadd.s32 %s158, 1
      %p162 = scmp.eq.s32.totalorder %s19, 1
      %p163 = scmp.ne.s32.totalorder %s158, %s160
      %p164 = scmp.eq.s32.totalorder %s19, 0
      %p165 = por %p163, %p164
      %p166 = scmp.ne.s32.totalorder %s158, %s160
      %p167 = scmp.eq.s32.totalorder %s24, 1
      %p168 = por %p166, %p167
      %p169 = scmp.ne.s32.totalorder %s160, %s161
      %p170 = scmp.eq.s32.totalorder %s24, 0
      %p171 = por %p169, %p170
      %p172 = scmp.ne.s32.totalorder %s160, %s161
      %p173 = scmp.eq.s32.totalorder %s25, 1
      %p174 = por %p172, %p173
      %p176 = scmp.ne.s32.totalorder %s161, %s175
      %p177 = scmp.eq.s32.totalorder %s25, 0
      %p178 = por %p176, %p177
      %s179 = ssub.s32 %s19, %s26
      %p180 = scmp.eq.s32.totalorder %s179, 0
      %s182 = sadd.s32 %s181, 1
      %s183 = scalar_select %p180, %s181, %s182
      %p186 = pneg %p180
      %p187 = scmp.eq.s32.totalorder %s19, 1
      %p188 = por %p186, %p187
      %p189 = scmp.ne.s32.totalorder %s181, %s184
      %p190 = scmp.eq.s32.totalorder %s19, 0
      %p191 = por %p189, %p190
      %p192 = scmp.ne.s32.totalorder %s181, %s184
      %p193 = scmp.eq.s32.totalorder %s24, 1
      %p194 = por %p192, %p193
      %p195 = scmp.ne.s32.totalorder %s184, %s185
      %p196 = scmp.eq.s32.totalorder %s24, 0
      %p197 = por %p195, %p196
      %p198 = scmp.ne.s32.totalorder %s184, %s185
      %p199 = scmp.eq.s32.totalorder %s25, 1
      %p200 = por %p198, %p199
      %p202 = scmp.ne.s32.totalorder %s185, %s201
      %p203 = scmp.eq.s32.totalorder %s25, 0
      %p204 = por %p202, %p203
      %p205 = scmp.le.s32.totalorder 1, %s19
      %p206 = scmp.lt.s32.totalorder %s19, 3
      %p207 = pnand %p205, %p206
      %p208 = pneg %p207
      // Predicated region
      $region9: #{tpu_custom_call.1} parent=5 // pred_check
        _
      $region10: #{tpu_custom_call.1} parent=5 // pred_check_branch
        %210 = sbr.rel (%p207) target = $region12
      $region11: #{tpu_custom_call.1} parent=5 // pred_region
        %s211 = ssub.s32 %s19, 1
        // Predicated region
        $region13: #{tpu_custom_call.1} parent=11 // pred_check
          %p212 = pneg %p66
        $region14: #{tpu_custom_call.1} parent=11 // pred_check_branch
          %214 = sbr.rel (%p212) target = $region16
        $region15: #{tpu_custom_call.1} parent=11 // pred_region
          _
        $region16: #{tpu_custom_call.1} parent=11 // pred_fallthru
          _
        // Predicated region
        $region17: #{tpu_custom_call.1} parent=11 // pred_check
          %p215 = pneg %p87
        $region18: #{tpu_custom_call.1} parent=11 // pred_check_branch
          %217 = sbr.rel (%p215) target = $region20
        $region19: #{tpu_custom_call.1} parent=11 // pred_region
          _
        $region20: #{tpu_custom_call.1} parent=11 // pred_fallthru
          _
        // Predicated region
        $region21: #{tpu_custom_call.1} parent=11 // pred_check
          %p218 = pneg %p108
        $region22: #{tpu_custom_call.1} parent=11 // pred_check_branch
          %220 = sbr.rel (%p218) target = $region24
        $region23: #{tpu_custom_call.1} parent=11 // pred_region
          _
        $region24: #{tpu_custom_call.1} parent=11 // pred_fallthru
          _
        // Predicated region
        $region25: #{tpu_custom_call.1} parent=11 // pred_check
          %p221 = pneg %p129
        $region26: #{tpu_custom_call.1} parent=11 // pred_check_branch
          %223 = sbr.rel (%p221) target = $region28
        $region27: #{tpu_custom_call.1} parent=11 // pred_region
          _
        $region28: #{tpu_custom_call.1} parent=11 // pred_fallthru
          _
        // Predicated region
        $region29: #{tpu_custom_call.1} parent=11 // pred_check
          %p224 = pneg %p150
        $region30: #{tpu_custom_call.1} parent=11 // pred_check_branch
          %226 = sbr.rel (%p224) target = $region32
        $region31: #{tpu_custom_call.1} parent=11 // pred_region
          _
        $region32: #{tpu_custom_call.1} parent=11 // pred_fallthru
          _
        // Predicated region
        $region33: #{tpu_custom_call.1} parent=11 // pred_check
          %p227 = pneg %p171
        $region34: #{tpu_custom_call.1} parent=11 // pred_check_branch
          %229 = sbr.rel (%p227) target = $region36
        $region35: #{tpu_custom_call.1} parent=11 // pred_region
          _
        $region36: #{tpu_custom_call.1} parent=11 // pred_fallthru
          _
      $region12: #{tpu_custom_call.1} parent=5 // pred_fallthru
        _
      %p230 = scmp.lt.s32.totalorder %s19, 2
      // Predicated region
      $region37: #{tpu_custom_call.1} parent=5 // pred_check
        %p231 = pneg %p230
      $region38: #{tpu_custom_call.1} parent=5 // pred_check_branch
        %233 = sbr.rel (%p231) target = $region40
      $region39: #{tpu_custom_call.1} parent=5 // pred_region
        // Predicated region
        $region41: #{tpu_custom_call.1} parent=39 // pred_check
          %p234 = pneg %p39
        $region42: #{tpu_custom_call.1} parent=39 // pred_check_branch
          %236 = sbr.rel (%p234) target = $region44
        $region43: #{tpu_custom_call.1} parent=39 // pred_region
          %s237 = sand.u32 %s29, 1
          %s238 = scalar_lea.sflag [#allocation4], %s237
          %s239 = sand.u32 %s29, 1
          %s240 = smul.addr %s239, 16
          %s241 = scalar_lea.vmem [#allocation3], %s240
          %s243 = ssub.s32 256, 256
          %244 = vsyncadd %s238, %s243
          %s245 = smul.addr %s19, 2
          %s246 = smul.addr %s245, 128
          %s247 = scalar_lea.hbm %s0, %s246
          %s249 = sshll.u32 %s241, 4
          %s250 = int_to_ptr.vmem [resolvable:$true] %s249
          %252 = dma.hbm_to_vmem [thread:$0]  %s247, 256, %s250, %s238
        $region44: #{tpu_custom_call.1} parent=39 // pred_fallthru
          _
      $region40: #{tpu_custom_call.1} parent=5 // pred_fallthru
        _
      %p253 = scmp.le.s32.totalorder 1, %s19
      %p254 = scmp.lt.s32.totalorder %s19, 3
      %p255 = pnand %p253, %p254
      %p256 = pneg %p255
      // Predicated region
      $region45: #{tpu_custom_call.1} parent=5 // pred_check
        _
      $region46: #{tpu_custom_call.1} parent=5 // pred_check_branch
        %258 = sbr.rel (%p255) target = $region48
      $region47: #{tpu_custom_call.1} parent=5 // pred_region
        %s259 = ssub.s32 %s19, 1
        %s260 = sand.u32 %s32, 1
        %s261 = scalar_lea.sflag [#allocation4], %s260
        %s262 = sand.u32 %s32, 1
        %s263 = smul.addr %s262, 16
        %s264 = scalar_lea.vmem [#allocation3], %s263
        // Predicated region
        $region49: #{tpu_custom_call.1} parent=47 // pred_check
          %p265 = pneg %p45
        $region50: #{tpu_custom_call.1} parent=47 // pred_check_branch
          %267 = sbr.rel (%p265) target = $region52
        $region51: #{tpu_custom_call.1} parent=47 // pred_region
          %268 = dma.done %s261, 256
        $region52: #{tpu_custom_call.1} parent=47 // pred_fallthru
          _
        %s269 = sand.u32 %s32, 1
        %s270 = scalar_lea.sflag [#allocation4], %s269
        %s271 = sand.u32 %s32, 1
        %s272 = smul.addr %s271, 16
        %s273 = scalar_lea.vmem [#allocation3], %s272
        %p274 = pneg %p45
        %p275 = pneg %p42
        %p276 = pneg %p66
        %p277 = pneg %p63
        %p278 = pneg %p87
        %p279 = pneg %p84
        %p280 = pneg %p108
        %p281 = pneg %p105
        %p282 = pneg %p129
        %p283 = pneg %p126
        %p284 = pneg %p150
        %p285 = pneg %p147
        %p286 = pneg %p171
        %p287 = pneg %p168
        %p288 = pneg %p197
        %p289 = pneg %p194
        %s290 = sand.u32 %s184, 1
        %s291 = scalar_lea.sflag [#allocation5], %s290
        %s292 = sand.u32 %s184, 1
        %s293 = smul.addr %s292, 16
        %s294 = scalar_lea.vmem [#allocation6], %s293
        %296 = vst [vmem:[#allocation2] sm:$0xff] 0.0
        %297 = vst [vmem:[#allocation2 + $0x18] sm:$0xff] 0.0
        %v298 = vlaneseq
        %v299 = vand.u32 %v298, 127
        %v300 = vadd.s32 %v299, 128
        %vm301 = vcmp.lt.s32.totalorder %v299, 0
        %v302 = vsub.s32 0, %v299
        %v303 = vsel %vm301, %v302, %v299
        %v304 = vshrl.u32 %v303, 4
        %v305 = vand.u32 %v303, 15
        %v306 = vsub.s32 0, %v305
        %v307 = vsel %vm301, %v306, %v305
        %vm308 = vcmp.lt.s32.totalorder %v300, 0
        %v309 = vsub.s32 0, %v300
        %v310 = vsel %vm308, %v309, %v300
        %v311 = vshrl.u32 %v310, 4
        %v312 = vand.u32 %v310, 15
        %v313 = vsub.s32 0, %v312
        %v314 = vsel %vm308, %v313, %v312
        %vm315 = vcmp.ne.s32.totalorder %v307, 0
        %vm316 = vcmp.ne.s32.totalorder %v314, 0
        %vm317 = vcmp.lt.s32.totalorder %v307, 0
        %vm318 = vcmp.lt.s32.totalorder %v314, 0
        %vm319 = vmand %vm317, %vm315
        %vm320 = vmand %vm318, %vm316
        %v321 = vadd.s32 %v307, 16
        %v322 = vadd.s32 %v314, 16
        %v323 = vsel %vm319, %v321, %v307
        %v324 = vsel %vm320, %v322, %v314
        %vm325 = vcmp.ne.s32.totalorder %v323, 0
        %vm326 = vcmp.ne.s32.totalorder %v324, 0
        %vm327 = vcmp.ne.s32.totalorder %v323, 15
        %vm328 = vcmp.ne.s32.totalorder %v324, 15
        %v329 = vld [vmem:[%s264] sm:$0xff]
        %v330 = vld [vmem:[%s264 + $0x8] sm:$0xff]
        %331 = vst [vmem:[#allocation2 + $0x8] sm:$0xff] %v329
        %332 = vst [vmem:[#allocation2 + $0x10] sm:$0xff] %v330
        %v333 = vld [vmem:[#allocation2] sm:$0xff]
        %v334 = vld [vmem:[#allocation2 + $0x8] sm:$0xff]
        %v335 = vld [vmem:[#allocation2 + $0x10] sm:$0xff]
        %v336 = vsel %vm325, 1, 0
        %v337 = vsel %vm326, 1, 0
        %vm338 = vcmp.eq.s32.totalorder %v336, 1
        %vm339 = vcmp.eq.s32.totalorder %v337, 1
        %343 = vrot.lane.b32.xlu0 %v333, 17
        %v344 = vpop.permute.xlu0 %343
        %345 = vrot.lane.b32.xlu0 %v334, 17
        %v346 = vpop.permute.xlu0 %345
        %347 = vrot.lane.b32.xlu0 %v335, 17
        %v348 = vpop.permute.xlu0 %347
        %vm349 = vcmask 138240
        %v350 = vsel %vm349, %v344, %v346
        %v351 = vsel %vm349, %v346, %v348
        %v354 = vsel %vm338, %v350, 0.0
        %v355 = vsel %vm339, %v351, 0.0
        %v356 = vsel %vm327, 1, 0
        %v357 = vsel %vm328, 1, 0
        %vm358 = vcmp.eq.s32.totalorder %v356, 1
        %vm359 = vcmp.eq.s32.totalorder %v357, 1
        %360 = vrot.lane.b32.xlu0 %v333, 15
        %v361 = vpop.permute.xlu0 %360
        %362 = vrot.lane.b32.xlu0 %v334, 15
        %v363 = vpop.permute.xlu0 %362
        %364 = vrot.lane.b32.xlu0 %v335, 15
        %v365 = vpop.permute.xlu0 %364
        %vm366 = vcmask 121856
        %v367 = vsel %vm366, %v361, %v363
        %v368 = vsel %vm366, %v363, %v365
        %v371 = vsel %vm358, %v367, 0.0
        %v372 = vsel %vm359, %v368, 0.0
        %373 = vrot.lane.b32.xlu0 %v333, 16
        %v374 = vpop.permute.xlu0 %373
        %375 = vrot.lane.b32.xlu0 %v334, 16
        %v376 = vpop.permute.xlu0 %375
        %377 = vrot.lane.b32.xlu0 %v335, 16
        %v378 = vpop.permute.xlu0 %377
        %vm379 = vcmask 130048
        %v380 = vsel %vm379, %v374, %v376
        %v381 = vsel %vm379, %v376, %v378
        %v384 = vpack.c.bf16 %v380, %v354
        %v385 = vpack.c.bf16 %v381, %v355
        %v386 = vpack.c.bf16 %v371, %v371
        %v387 = vpack.c.bf16 %v372, %v372
        %v388 = vld [vmem:[%s1] sm:$0xf]
        %389 = vrot.lane.b32.xlu0 %v333, 1
        %v390 = vpop.permute.xlu0 %389
        %391 = vrot.lane.b32.xlu0 %v334, 1
        %v392 = vpop.permute.xlu0 %391
        %393 = vrot.lane.b32.xlu0 %v335, 1
        %v394 = vpop.permute.xlu0 %393
        %vm395 = vcmask 7168
        %v396 = vsel %vm395, %v390, %v392
        %v397 = vsel %vm395, %v392, %v394
        %v400 = vsel %vm338, %v396, 0.0
        %v401 = vsel %vm339, %v397, 0.0
        %v402 = vld [vmem:[#allocation2 + $0x8] sm:$0xff]
        %v403 = vld [vmem:[#allocation2 + $0x10] sm:$0xff]
        %v404 = vld [vmem:[#allocation2 + $0x18] sm:$0xff]
        %408 = vrot.lane.b32.xlu0 %v402, 127
        %v409 = vpop.permute.xlu0 %408
        %410 = vrot.lane.b32.xlu0 %v403, 127
        %v411 = vpop.permute.xlu0 %410
        %412 = vrot.lane.b32.xlu0 %v404, 127
        %v413 = vpop.permute.xlu0 %412
        %vm414 = vcmask 1039360
        %v415 = vsel %vm414, %v409, %v411
        %v416 = vsel %vm414, %v411, %v413
        %v419 = vsel %vm358, %v415, 0.0
        %v420 = vsel %vm359, %v416, 0.0
        %v421 = vpack.c.bf16 %v334, %v400
        %v422 = vpack.c.bf16 %v335, %v401
        %v423 = vpack.c.bf16 %v419, %v419
        %v424 = vpack.c.bf16 %v420, %v420
        %v426 = vunpack.c.l.b16 %v388
        %v427 = vpack.c.b16 %v426, %v426
        %428 = vrot.lane.b32.xlu0 %v427, 104
        %v429 = vpop.permute.xlu0 %428
        %vm430 = vcmask 195584
        %v432 = vsel %vm430, %v429, 0
        %vm434 = vcmask 1043456
        %v436 = vsel %vm434, %v423, 0
        %v439 = vsel %vm434, %v424, 0
        %441 = vmatprep.subr.bf16.mxu0 %v422
        %442 = vmatpush1.bf16.msra.mxu0 %v421
        %443 = vmatprep.subr.bf16.mxu0 %v439
        %444 = vmatpush1.bf16.msra.mxu0 %v436
        %445 = vmatprep.subr.bf16.mxu0 0
        %446 = vmatpush1.bf16.msra.mxu0 0
        %447 = vmatprep.subr.bf16.mxu0 0
        %448 = vmatpush1.bf16.msra.mxu0 0
        %449 = vmatprep.subr.bf16.mxu0 0
        %450 = vmatpush1.bf16.msra.mxu0 0
        %451 = vmatprep.subr.bf16.mxu0 0
        %452 = vmatpush1.bf16.msra.mxu0 0
        %453 = vmatprep.subr.bf16.mxu0 0
        %454 = vmatpush1.bf16.msra.mxu0 0
        %455 = vmatprep.subr.bf16.mxu0 0
        %456 = vmatpush1.bf16.msra.mxu0 0
        %457 = vmatprep.subr.bf16.mxu0 0
        %458 = vmatpush1.bf16.msra.mxu0 0
        %459 = vmatprep.subr.bf16.mxu0 0
        %460 = vmatpush1.bf16.msra.mxu0 0
        %461 = vmatprep.subr.bf16.mxu0 0
        %462 = vmatpush1.bf16.msra.mxu0 0
        %463 = vmatprep.subr.bf16.mxu0 0
        %464 = vmatpush1.bf16.msra.mxu0 0
        %465 = vmatprep.subr.bf16.mxu0 0
        %466 = vmatpush1.bf16.msra.mxu0 0
        %467 = vmatprep.subr.bf16.mxu0 0
        %468 = vmatpush1.bf16.msra.mxu0 0
        %469 = vmatprep.subr.bf16.mxu0 0
        %470 = vmatpush1.bf16.msra.mxu0 0
        %471 = vmatprep.subr.bf16.mxu0 0
        %472 = vmatpush1.bf16.msra.mxu0 0
        %473 = vmatprep.mubr.bf16.mxu0 0
        %474 = vmatmul.mubr.bf16.gmra.mrb[0].mxu0 %v432
        %v475 = vpop.f32.mrb[0].mxu0
        %v476 = vadd.f32 0.0, %v475
        %v477 = vpop.f32.mrb[0].mxu0
        %v478 = vadd.f32 0.0, %v477
        %v479 = vpop.f32.mrb[0].mxu0
        %v480 = vpop.f32.mrb[0].mxu0
        %481 = vdwg.mxu0
        %v483 = vsel %vm430, %v388, 0
        %v486 = vsel %vm434, %v386, 0
        %v489 = vsel %vm434, %v387, 0
        %491 = vmatprep.subr.bf16.mxu0 %v385
        %492 = vmatpush1.bf16.msra.mxu0 %v384
        %493 = vmatprep.subr.bf16.mxu0 %v489
        %494 = vmatpush1.bf16.msra.mxu0 %v486
        %495 = vmatprep.subr.bf16.mxu0 0
        %496 = vmatpush1.bf16.msra.mxu0 0
        %497 = vmatprep.subr.bf16.mxu0 0
        %498 = vmatpush1.bf16.msra.mxu0 0
        %499 = vmatprep.subr.bf16.mxu0 0
        %500 = vmatpush1.bf16.msra.mxu0 0
        %501 = vmatprep.subr.bf16.mxu0 0
        %502 = vmatpush1.bf16.msra.mxu0 0
        %503 = vmatprep.subr.bf16.mxu0 0
        %504 = vmatpush1.bf16.msra.mxu0 0
        %505 = vmatprep.subr.bf16.mxu0 0
        %506 = vmatpush1.bf16.msra.mxu0 0
        %507 = vmatprep.subr.bf16.mxu0 0
        %508 = vmatpush1.bf16.msra.mxu0 0
        %509 = vmatprep.subr.bf16.mxu0 0
        %510 = vmatpush1.bf16.msra.mxu0 0
        %511 = vmatprep.subr.bf16.mxu0 0
        %512 = vmatpush1.bf16.msra.mxu0 0
        %513 = vmatprep.subr.bf16.mxu0 0
        %514 = vmatpush1.bf16.msra.mxu0 0
        %515 = vmatprep.subr.bf16.mxu0 0
        %516 = vmatpush1.bf16.msra.mxu0 0
        %517 = vmatprep.subr.bf16.mxu0 0
        %518 = vmatpush1.bf16.msra.mxu0 0
        %519 = vmatprep.subr.bf16.mxu0 0
        %520 = vmatpush1.bf16.msra.mxu0 0
        %521 = vmatprep.subr.bf16.mxu0 0
        %522 = vmatpush1.bf16.msra.mxu0 0
        %523 = vmatprep.mubr.bf16.mxu0 0
        %524 = vmatmul.mubr.bf16.gmra.mrb[0].mxu0 %v483
        %v525 = vpop.f32.mrb[0].mxu0
        %v526 = vadd.f32 %v476, %v525
        %v527 = vpop.f32.mrb[0].mxu0
        %v528 = vadd.f32 %v478, %v527
        %v529 = vpop.f32.mrb[0].mxu0
        %v530 = vpop.f32.mrb[0].mxu0
        %531 = vdwg.mxu0
        %532 = vrot.lane.b32.xlu0 %v402, 113
        %v533 = vpop.permute.xlu0 %532
        %534 = vrot.lane.b32.xlu0 %v403, 113
        %v535 = vpop.permute.xlu0 %534
        %536 = vrot.lane.b32.xlu0 %v404, 113
        %v537 = vpop.permute.xlu0 %536
        %vm538 = vcmask 924672
        %v539 = vsel %vm538, %v533, %v535
        %v540 = vsel %vm538, %v535, %v537
        %v543 = vsel %vm338, %v539, 0.0
        %v544 = vsel %vm339, %v540, 0.0
        %545 = vrot.lane.b32.xlu0 %v402, 111
        %v546 = vpop.permute.xlu0 %545
        %547 = vrot.lane.b32.xlu0 %v403, 111
        %v548 = vpop.permute.xlu0 %547
        %549 = vrot.lane.b32.xlu0 %v404, 111
        %v550 = vpop.permute.xlu0 %549
        %vm551 = vcmask 908288
        %v552 = vsel %vm551, %v546, %v548
        %v553 = vsel %vm551, %v548, %v550
        %v556 = vsel %vm358, %v552, 0.0
        %v557 = vsel %vm359, %v553, 0.0
        %558 = vrot.lane.b32.xlu0 %v402, 112
        %v559 = vpop.permute.xlu0 %558
        %560 = vrot.lane.b32.xlu0 %v403, 112
        %v561 = vpop.permute.xlu0 %560
        %562 = vrot.lane.b32.xlu0 %v404, 112
        %v563 = vpop.permute.xlu0 %562
        %vm564 = vcmask 916480
        %v565 = vsel %vm564, %v559, %v561
        %v566 = vsel %vm564, %v561, %v563
        %v569 = vpack.c.bf16 %v565, %v543
        %v570 = vpack.c.bf16 %v566, %v544
        %v571 = vpack.c.bf16 %v556, %v556
        %v572 = vpack.c.bf16 %v557, %v557
        %573 = vrot.lane.b32.xlu0 %v427, 80
        %v574 = vpop.permute.xlu0 %573
        %v576 = vsel %vm430, %v574, 0
        %v579 = vsel %vm434, %v571, 0
        %v582 = vsel %vm434, %v572, 0
        %584 = vmatprep.subr.bf16.mxu0 %v570
        %585 = vmatpush1.bf16.msra.mxu0 %v569
        %586 = vmatprep.subr.bf16.mxu0 %v582
        %587 = vmatpush1.bf16.msra.mxu0 %v579
        %588 = vmatprep.subr.bf16.mxu0 0
        %589 = vmatpush1.bf16.msra.mxu0 0
        %590 = vmatprep.subr.bf16.mxu0 0
        %591 = vmatpush1.bf16.msra.mxu0 0
        %592 = vmatprep.subr.bf16.mxu0 0
        %593 = vmatpush1.bf16.msra.mxu0 0
        %594 = vmatprep.subr.bf16.mxu0 0
        %595 = vmatpush1.bf16.msra.mxu0 0
        %596 = vmatprep.subr.bf16.mxu0 0
        %597 = vmatpush1.bf16.msra.mxu0 0
        %598 = vmatprep.subr.bf16.mxu0 0
        %599 = vmatpush1.bf16.msra.mxu0 0
        %600 = vmatprep.subr.bf16.mxu0 0
        %601 = vmatpush1.bf16.msra.mxu0 0
        %602 = vmatprep.subr.bf16.mxu0 0
        %603 = vmatpush1.bf16.msra.mxu0 0
        %604 = vmatprep.subr.bf16.mxu0 0
        %605 = vmatpush1.bf16.msra.mxu0 0
        %606 = vmatprep.subr.bf16.mxu0 0
        %607 = vmatpush1.bf16.msra.mxu0 0
        %608 = vmatprep.subr.bf16.mxu0 0
        %609 = vmatpush1.bf16.msra.mxu0 0
        %610 = vmatprep.subr.bf16.mxu0 0
        %611 = vmatpush1.bf16.msra.mxu0 0
        %612 = vmatprep.subr.bf16.mxu0 0
        %613 = vmatpush1.bf16.msra.mxu0 0
        %614 = vmatprep.subr.bf16.mxu0 0
        %615 = vmatpush1.bf16.msra.mxu0 0
        %616 = vmatprep.mubr.bf16.mxu0 0
        %617 = vmatmul.mubr.bf16.gmra.mrb[0].mxu0 %v576
        %v618 = vpop.f32.mrb[0].mxu0
        %v619 = vadd.f32 0.0, %v618
        %v620 = vpop.f32.mrb[0].mxu0
        %v621 = vadd.f32 0.0, %v620
        %v622 = vpop.f32.mrb[0].mxu0
        %v623 = vpop.f32.mrb[0].mxu0
        %624 = vdwg.mxu0
        %v625 = vadd.f32 %v526, %v619
        %v626 = vadd.f32 %v528, %v621
        %v627 = vld [vmem:[%s2] sm:$0xff]
        %629 = vset.pattern.permute.xlu0 0
        %630 = vperm.xlu0 %629, %v627
        %v631 = vpop.permute.xlu0 %630
        %v633 = vadd.f32 %v625, %v631
        %v634 = vadd.f32 %v626, %v631
        %v635 = vmul.f32 %v633, 0.1
        %v636 = vmul.f32 %v634, 0.1
        %v637 = vmax.f32 %v633, %v635
        %v638 = vmax.f32 %v634, %v636
        %639 = vst [vmem:[#allocation2 + $0x8] sm:$0xff] %v637
        %640 = vst [vmem:[#allocation2 + $0x10] sm:$0xff] %v638
        %v641 = vld [vmem:[#allocation2] sm:$0xff]
        %v642 = vld [vmem:[#allocation2 + $0x8] sm:$0xff]
        %v643 = vld [vmem:[#allocation2 + $0x10] sm:$0xff]
        %647 = vrot.lane.b32.xlu0 %v641, 17
        %v648 = vpop.permute.xlu0 %647
        %649 = vrot.lane.b32.xlu0 %v642, 17
        %v650 = vpop.permute.xlu0 %649
        %651 = vrot.lane.b32.xlu0 %v643, 17
        %v652 = vpop.permute.xlu0 %651
        %v653 = vsel %vm349, %v648, %v650
        %v654 = vsel %vm349, %v650, %v652
        %v657 = vsel %vm338, %v653, 0.0
        %v658 = vsel %vm339, %v654, 0.0
        %659 = vrot.lane.b32.xlu0 %v641, 15
        %v660 = vpop.permute.xlu0 %659
        %661 = vrot.lane.b32.xlu0 %v642, 15
        %v662 = vpop.permute.xlu0 %661
        %663 = vrot.lane.b32.xlu0 %v643, 15
        %v664 = vpop.permute.xlu0 %663
        %v665 = vsel %vm366, %v660, %v662
        %v666 = vsel %vm366, %v662, %v664
        %v669 = vsel %vm358, %v665, 0.0
        %v670 = vsel %vm359, %v666, 0.0
        %671 = vrot.lane.b32.xlu0 %v641, 16
        %v672 = vpop.permute.xlu0 %671
        %673 = vrot.lane.b32.xlu0 %v642, 16
        %v674 = vpop.permute.xlu0 %673
        %675 = vrot.lane.b32.xlu0 %v643, 16
        %v676 = vpop.permute.xlu0 %675
        %v677 = vsel %vm379, %v672, %v674
        %v678 = vsel %vm379, %v674, %v676
        %v681 = vpack.c.bf16 %v677, %v657
        %v682 = vpack.c.bf16 %v678, %v658
        %v683 = vpack.c.bf16 %v669, %v669
        %v684 = vpack.c.bf16 %v670, %v670
        %v685 = vld [vmem:[%s3] sm:$0xf]
        %686 = vrot.lane.b32.xlu0 %v641, 1
        %v687 = vpop.permute.xlu0 %686
        %688 = vrot.lane.b32.xlu0 %v642, 1
        %v689 = vpop.permute.xlu0 %688
        %690 = vrot.lane.b32.xlu0 %v643, 1
        %v691 = vpop.permute.xlu0 %690
        %v692 = vsel %vm395, %v687, %v689
        %v693 = vsel %vm395, %v689, %v691
        %v696 = vsel %vm338, %v692, 0.0
        %v697 = vsel %vm339, %v693, 0.0
        %v698 = vld [vmem:[#allocation2 + $0x8] sm:$0xff]
        %v699 = vld [vmem:[#allocation2 + $0x10] sm:$0xff]
        %v700 = vld [vmem:[#allocation2 + $0x18] sm:$0xff]
        %704 = vrot.lane.b32.xlu0 %v698, 127
        %v705 = vpop.permute.xlu0 %704
        %706 = vrot.lane.b32.xlu0 %v699, 127
        %v707 = vpop.permute.xlu0 %706
        %708 = vrot.lane.b32.xlu0 %v700, 127
        %v709 = vpop.permute.xlu0 %708
        %v710 = vsel %vm414, %v705, %v707
        %v711 = vsel %vm414, %v707, %v709
        %v714 = vsel %vm358, %v710, 0.0
        %v715 = vsel %vm359, %v711, 0.0
        %v716 = vpack.c.bf16 %v642, %v696
        %v717 = vpack.c.bf16 %v643, %v697
        %v718 = vpack.c.bf16 %v714, %v714
        %v719 = vpack.c.bf16 %v715, %v715
        %v721 = vunpack.c.l.b16 %v685
        %v722 = vpack.c.b16 %v721, %v721
        %723 = vrot.lane.b32.xlu0 %v722, 104
        %v724 = vpop.permute.xlu0 %723
        %v726 = vsel %vm430, %v724, 0
        %v729 = vsel %vm434, %v718, 0
        %v732 = vsel %vm434, %v719, 0
        %734 = vmatprep.subr.bf16.mxu0 %v717
        %735 = vmatpush1.bf16.msra.mxu0 %v716
        %736 = vmatprep.subr.bf16.mxu0 %v732
        %737 = vmatpush1.bf16.msra.mxu0 %v729
        %738 = vmatprep.subr.bf16.mxu0 0
        %739 = vmatpush1.bf16.msra.mxu0 0
        %740 = vmatprep.subr.bf16.mxu0 0
        %741 = vmatpush1.bf16.msra.mxu0 0
        %742 = vmatprep.subr.bf16.mxu0 0
        %743 = vmatpush1.bf16.msra.mxu0 0
        %744 = vmatprep.subr.bf16.mxu0 0
        %745 = vmatpush1.bf16.msra.mxu0 0
        %746 = vmatprep.subr.bf16.mxu0 0
        %747 = vmatpush1.bf16.msra.mxu0 0
        %748 = vmatprep.subr.bf16.mxu0 0
        %749 = vmatpush1.bf16.msra.mxu0 0
        %750 = vmatprep.subr.bf16.mxu0 0
        %751 = vmatpush1.bf16.msra.mxu0 0
        %752 = vmatprep.subr.bf16.mxu0 0
        %753 = vmatpush1.bf16.msra.mxu0 0
        %754 = vmatprep.subr.bf16.mxu0 0
        %755 = vmatpush1.bf16.msra.mxu0 0
        %756 = vmatprep.subr.bf16.mxu0 0
        %757 = vmatpush1.bf16.msra.mxu0 0
        %758 = vmatprep.subr.bf16.mxu0 0
        %759 = vmatpush1.bf16.msra.mxu0 0
        %760 = vmatprep.subr.bf16.mxu0 0
        %761 = vmatpush1.bf16.msra.mxu0 0
        %762 = vmatprep.subr.bf16.mxu0 0
        %763 = vmatpush1.bf16.msra.mxu0 0
        %764 = vmatprep.subr.bf16.mxu0 0
        %765 = vmatpush1.bf16.msra.mxu0 0
        %766 = vmatprep.mubr.bf16.mxu0 0
        %767 = vmatmul.mubr.bf16.gmra.mrb[0].mxu0 %v726
        %v768 = vpop.f32.mrb[0].mxu0
        %v769 = vadd.f32 0.0, %v768
        %v770 = vpop.f32.mrb[0].mxu0
        %v771 = vadd.f32 0.0, %v770
        %v772 = vpop.f32.mrb[0].mxu0
        %v773 = vpop.f32.mrb[0].mxu0
        %774 = vdwg.mxu0
        %v776 = vsel %vm430, %v685, 0
        %v779 = vsel %vm434, %v683, 0
        %v782 = vsel %vm434, %v684, 0
        %784 = vmatprep.subr.bf16.mxu0 %v682
        %785 = vmatpush1.bf16.msra.mxu0 %v681
        %786 = vmatprep.subr.bf16.mxu0 %v782
        %787 = vmatpush1.bf16.msra.mxu0 %v779
        %788 = vmatprep.subr.bf16.mxu0 0
        %789 = vmatpush1.bf16.msra.mxu0 0
        %790 = vmatprep.subr.bf16.mxu0 0
        %791 = vmatpush1.bf16.msra.mxu0 0
        %792 = vmatprep.subr.bf16.mxu0 0
        %793 = vmatpush1.bf16.msra.mxu0 0
        %794 = vmatprep.subr.bf16.mxu0 0
        %795 = vmatpush1.bf16.msra.mxu0 0
        %796 = vmatprep.subr.bf16.mxu0 0
        %797 = vmatpush1.bf16.msra.mxu0 0
        %798 = vmatprep.subr.bf16.mxu0 0
        %799 = vmatpush1.bf16.msra.mxu0 0
        %800 = vmatprep.subr.bf16.mxu0 0
        %801 = vmatpush1.bf16.msra.mxu0 0
        %802 = vmatprep.subr.bf16.mxu0 0
        %803 = vmatpush1.bf16.msra.mxu0 0
        %804 = vmatprep.subr.bf16.mxu0 0
        %805 = vmatpush1.bf16.msra.mxu0 0
        %806 = vmatprep.subr.bf16.mxu0 0
        %807 = vmatpush1.bf16.msra.mxu0 0
        %808 = vmatprep.subr.bf16.mxu0 0
        %809 = vmatpush1.bf16.msra.mxu0 0
        %810 = vmatprep.subr.bf16.mxu0 0
        %811 = vmatpush1.bf16.msra.mxu0 0
        %812 = vmatprep.subr.bf16.mxu0 0
        %813 = vmatpush1.bf16.msra.mxu0 0
        %814 = vmatprep.subr.bf16.mxu0 0
        %815 = vmatpush1.bf16.msra.mxu0 0
        %816 = vmatprep.mubr.bf16.mxu0 0
        %817 = vmatmul.mubr.bf16.gmra.mrb[0].mxu0 %v776
        %v818 = vpop.f32.mrb[0].mxu0
        %v819 = vadd.f32 %v769, %v818
        %v820 = vpop.f32.mrb[0].mxu0
        %v821 = vadd.f32 %v771, %v820
        %v822 = vpop.f32.mrb[0].mxu0
        %v823 = vpop.f32.mrb[0].mxu0
        %824 = vdwg.mxu0
        %825 = vrot.lane.b32.xlu0 %v698, 113
        %v826 = vpop.permute.xlu0 %825
        %827 = vrot.lane.b32.xlu0 %v699, 113
        %v828 = vpop.permute.xlu0 %827
        %829 = vrot.lane.b32.xlu0 %v700, 113
        %v830 = vpop.permute.xlu0 %829
        %v831 = vsel %vm538, %v826, %v828
        %v832 = vsel %vm538, %v828, %v830
        %v835 = vsel %vm338, %v831, 0.0
        %v836 = vsel %vm339, %v832, 0.0
        %837 = vrot.lane.b32.xlu0 %v698, 111
        %v838 = vpop.permute.xlu0 %837
        %839 = vrot.lane.b32.xlu0 %v699, 111
        %v840 = vpop.permute.xlu0 %839
        %841 = vrot.lane.b32.xlu0 %v700, 111
        %v842 = vpop.permute.xlu0 %841
        %v843 = vsel %vm551, %v838, %v840
        %v844 = vsel %vm551, %v840, %v842
        %v847 = vsel %vm358, %v843, 0.0
        %v848 = vsel %vm359, %v844, 0.0
        %849 = vrot.lane.b32.xlu0 %v698, 112
        %v850 = vpop.permute.xlu0 %849
        %851 = vrot.lane.b32.xlu0 %v699, 112
        %v852 = vpop.permute.xlu0 %851
        %853 = vrot.lane.b32.xlu0 %v700, 112
        %v854 = vpop.permute.xlu0 %853
        %v855 = vsel %vm564, %v850, %v852
        %v856 = vsel %vm564, %v852, %v854
        %v859 = vpack.c.bf16 %v855, %v835
        %v860 = vpack.c.bf16 %v856, %v836
        %v861 = vpack.c.bf16 %v847, %v847
        %v862 = vpack.c.bf16 %v848, %v848
        %863 = vrot.lane.b32.xlu0 %v722, 80
        %v864 = vpop.permute.xlu0 %863
        %v866 = vsel %vm430, %v864, 0
        %v869 = vsel %vm434, %v861, 0
        %v872 = vsel %vm434, %v862, 0
        %874 = vmatprep.subr.bf16.mxu0 %v860
        %875 = vmatpush1.bf16.msra.mxu0 %v859
        %876 = vmatprep.subr.bf16.mxu0 %v872
        %877 = vmatpush1.bf16.msra.mxu0 %v869
        %878 = vmatprep.subr.bf16.mxu0 0
        %879 = vmatpush1.bf16.msra.mxu0 0
        %880 = vmatprep.subr.bf16.mxu0 0
        %881 = vmatpush1.bf16.msra.mxu0 0
        %882 = vmatprep.subr.bf16.mxu0 0
        %883 = vmatpush1.bf16.msra.mxu0 0
        %884 = vmatprep.subr.bf16.mxu0 0
        %885 = vmatpush1.bf16.msra.mxu0 0
        %886 = vmatprep.subr.bf16.mxu0 0
        %887 = vmatpush1.bf16.msra.mxu0 0
        %888 = vmatprep.subr.bf16.mxu0 0
        %889 = vmatpush1.bf16.msra.mxu0 0
        %890 = vmatprep.subr.bf16.mxu0 0
        %891 = vmatpush1.bf16.msra.mxu0 0
        %892 = vmatprep.subr.bf16.mxu0 0
        %893 = vmatpush1.bf16.msra.mxu0 0
        %894 = vmatprep.subr.bf16.mxu0 0
        %895 = vmatpush1.bf16.msra.mxu0 0
        %896 = vmatprep.subr.bf16.mxu0 0
        %897 = vmatpush1.bf16.msra.mxu0 0
        %898 = vmatprep.subr.bf16.mxu0 0
        %899 = vmatpush1.bf16.msra.mxu0 0
        %900 = vmatprep.subr.bf16.mxu0 0
        %901 = vmatpush1.bf16.msra.mxu0 0
        %902 = vmatprep.subr.bf16.mxu0 0
        %903 = vmatpush1.bf16.msra.mxu0 0
        %904 = vmatprep.subr.bf16.mxu0 0
        %905 = vmatpush1.bf16.msra.mxu0 0
        %906 = vmatprep.mubr.bf16.mxu0 0
        %907 = vmatmul.mubr.bf16.gmra.mrb[0].mxu0 %v866
        %v908 = vpop.f32.mrb[0].mxu0
        %v909 = vadd.f32 0.0, %v908
        %v910 = vpop.f32.mrb[0].mxu0
        %v911 = vadd.f32 0.0, %v910
        %v912 = vpop.f32.mrb[0].mxu0
        %v913 = vpop.f32.mrb[0].mxu0
        %914 = vdwg.mxu0
        %v915 = vadd.f32 %v819, %v909
        %v916 = vadd.f32 %v821, %v911
        %v917 = vld [vmem:[%s4] sm:$0xff]
        %919 = vset.pattern.permute.xlu0 0
        %920 = vperm.xlu0 %919, %v917
        %v921 = vpop.permute.xlu0 %920
        %v923 = vadd.f32 %v915, %v921
        %v924 = vadd.f32 %v916, %v921
        %v925 = vmul.f32 %v923, 0.1
        %v926 = vmul.f32 %v924, 0.1
        %v927 = vmax.f32 %v923, %v925
        %v928 = vmax.f32 %v924, %v926
        %929 = vst [vmem:[#allocation2 + $0x8] sm:$0xff] %v927
        %930 = vst [vmem:[#allocation2 + $0x10] sm:$0xff] %v928
        %v931 = vld [vmem:[#allocation2] sm:$0xff]
        %v932 = vld [vmem:[#allocation2 + $0x8] sm:$0xff]
        %v933 = vld [vmem:[#allocation2 + $0x10] sm:$0xff]
        %937 = vrot.lane.b32.xlu0 %v931, 17
        %v938 = vpop.permute.xlu0 %937
        %939 = vrot.lane.b32.xlu0 %v932, 17
        %v940 = vpop.permute.xlu0 %939
        %941 = vrot.lane.b32.xlu0 %v933, 17
        %v942 = vpop.permute.xlu0 %941
        %v943 = vsel %vm349, %v938, %v940
        %v944 = vsel %vm349, %v940, %v942
        %v947 = vsel %vm338, %v943, 0.0
        %v948 = vsel %vm339, %v944, 0.0
        %949 = vrot.lane.b32.xlu0 %v931, 15
        %v950 = vpop.permute.xlu0 %949
        %951 = vrot.lane.b32.xlu0 %v932, 15
        %v952 = vpop.permute.xlu0 %951
        %953 = vrot.lane.b32.xlu0 %v933, 15
        %v954 = vpop.permute.xlu0 %953
        %v955 = vsel %vm366, %v950, %v952
        %v956 = vsel %vm366, %v952, %v954
        %v959 = vsel %vm358, %v955, 0.0
        %v960 = vsel %vm359, %v956, 0.0
        %961 = vrot.lane.b32.xlu0 %v931, 16
        %v962 = vpop.permute.xlu0 %961
        %963 = vrot.lane.b32.xlu0 %v932, 16
        %v964 = vpop.permute.xlu0 %963
        %965 = vrot.lane.b32.xlu0 %v933, 16
        %v966 = vpop.permute.xlu0 %965
        %v967 = vsel %vm379, %v962, %v964
        %v968 = vsel %vm379, %v964, %v966
        %v971 = vpack.c.bf16 %v967, %v947
        %v972 = vpack.c.bf16 %v968, %v948
        %v973 = vpack.c.bf16 %v959, %v959
        %v974 = vpack.c.bf16 %v960, %v960
        %v975 = vld [vmem:[%s5] sm:$0xf]
        %976 = vrot.lane.b32.xlu0 %v931, 1
        %v977 = vpop.permute.xlu0 %976
        %978 = vrot.lane.b32.xlu0 %v932, 1
        %v979 = vpop.permute.xlu0 %978
        %980 = vrot.lane.b32.xlu0 %v933, 1
        %v981 = vpop.permute.xlu0 %980
        %v982 = vsel %vm395, %v977, %v979
        %v983 = vsel %vm395, %v979, %v981
        %v986 = vsel %vm338, %v982, 0.0
        %v987 = vsel %vm339, %v983, 0.0
        %v988 = vld [vmem:[#allocation2 + $0x8] sm:$0xff]
        %v989 = vld [vmem:[#allocation2 + $0x10] sm:$0xff]
        %v990 = vld [vmem:[#allocation2 + $0x18] sm:$0xff]
        %994 = vrot.lane.b32.xlu0 %v988, 127
        %v995 = vpop.permute.xlu0 %994
        %996 = vrot.lane.b32.xlu0 %v989, 127
        %v997 = vpop.permute.xlu0 %996
        %998 = vrot.lane.b32.xlu0 %v990, 127
        %v999 = vpop.permute.xlu0 %998
        %v1000 = vsel %vm414, %v995, %v997
        %v1001 = vsel %vm414, %v997, %v999
        %v1004 = vsel %vm358, %v1000, 0.0
        %v1005 = vsel %vm359, %v1001, 0.0
        %v1006 = vpack.c.bf16 %v932, %v986
        %v1007 = vpack.c.bf16 %v933, %v987
        %v1008 = vpack.c.bf16 %v1004, %v1004
        %v1009 = vpack.c.bf16 %v1005, %v1005
        %v1011 = vunpack.c.l.b16 %v975
        %v1012 = vpack.c.b16 %v1011, %v1011
        %1013 = vrot.lane.b32.xlu0 %v1012, 104
        %v1014 = vpop.permute.xlu0 %1013
        %v1016 = vsel %vm430, %v1014, 0
        %v1019 = vsel %vm434, %v1008, 0
        %v1022 = vsel %vm434, %v1009, 0
        %1024 = vmatprep.subr.bf16.mxu0 %v1007
        %1025 = vmatpush1.bf16.msra.mxu0 %v1006
        %1026 = vmatprep.subr.bf16.mxu0 %v1022
        %1027 = vmatpush1.bf16.msra.mxu0 %v1019
        %1028 = vmatprep.subr.bf16.mxu0 0
        %1029 = vmatpush1.bf16.msra.mxu0 0
        %1030 = vmatprep.subr.bf16.mxu0 0
        %1031 = vmatpush1.bf16.msra.mxu0 0
        %1032 = vmatprep.subr.bf16.mxu0 0
        %1033 = vmatpush1.bf16.msra.mxu0 0
        %1034 = vmatprep.subr.bf16.mxu0 0
        %1035 = vmatpush1.bf16.msra.mxu0 0
        %1036 = vmatprep.subr.bf16.mxu0 0
        %1037 = vmatpush1.bf16.msra.mxu0 0
        %1038 = vmatprep.subr.bf16.mxu0 0
        %1039 = vmatpush1.bf16.msra.mxu0 0
        %1040 = vmatprep.subr.bf16.mxu0 0
        %1041 = vmatpush1.bf16.msra.mxu0 0
        %1042 = vmatprep.subr.bf16.mxu0 0
        %1043 = vmatpush1.bf16.msra.mxu0 0
        %1044 = vmatprep.subr.bf16.mxu0 0
        %1045 = vmatpush1.bf16.msra.mxu0 0
        %1046 = vmatprep.subr.bf16.mxu0 0
        %1047 = vmatpush1.bf16.msra.mxu0 0
        %1048 = vmatprep.subr.bf16.mxu0 0
        %1049 = vmatpush1.bf16.msra.mxu0 0
        %1050 = vmatprep.subr.bf16.mxu0 0
        %1051 = vmatpush1.bf16.msra.mxu0 0
        %1052 = vmatprep.subr.bf16.mxu0 0
        %1053 = vmatpush1.bf16.msra.mxu0 0
        %1054 = vmatprep.subr.bf16.mxu0 0
        %1055 = vmatpush1.bf16.msra.mxu0 0
        %1056 = vmatprep.mubr.bf16.mxu0 0
        %1057 = vmatmul.mubr.bf16.gmra.mrb[0].mxu0 %v1016
        %v1058 = vpop.f32.mrb[0].mxu0
        %v1059 = vadd.f32 0.0, %v1058
        %v1060 = vpop.f32.mrb[0].mxu0
        %v1061 = vadd.f32 0.0, %v1060
        %v1062 = vpop.f32.mrb[0].mxu0
        %v1063 = vpop.f32.mrb[0].mxu0
        %1064 = vdwg.mxu0
        %v1066 = vsel %vm430, %v975, 0
        %v1069 = vsel %vm434, %v973, 0
        %v1072 = vsel %vm434, %v974, 0
        %1074 = vmatprep.subr.bf16.mxu0 %v972
        %1075 = vmatpush1.bf16.msra.mxu0 %v971
        %1076 = vmatprep.subr.bf16.mxu0 %v1072
        %1077 = vmatpush1.bf16.msra.mxu0 %v1069
        %1078 = vmatprep.subr.bf16.mxu0 0
        %1079 = vmatpush1.bf16.msra.mxu0 0
        %1080 = vmatprep.subr.bf16.mxu0 0
        %1081 = vmatpush1.bf16.msra.mxu0 0
        %1082 = vmatprep.subr.bf16.mxu0 0
        %1083 = vmatpush1.bf16.msra.mxu0 0
        %1084 = vmatprep.subr.bf16.mxu0 0
        %1085 = vmatpush1.bf16.msra.mxu0 0
        %1086 = vmatprep.subr.bf16.mxu0 0
        %1087 = vmatpush1.bf16.msra.mxu0 0
        %1088 = vmatprep.subr.bf16.mxu0 0
        %1089 = vmatpush1.bf16.msra.mxu0 0
        %1090 = vmatprep.subr.bf16.mxu0 0
        %1091 = vmatpush1.bf16.msra.mxu0 0
        %1092 = vmatprep.subr.bf16.mxu0 0
        %1093 = vmatpush1.bf16.msra.mxu0 0
        %1094 = vmatprep.subr.bf16.mxu0 0
        %1095 = vmatpush1.bf16.msra.mxu0 0
        %1096 = vmatprep.subr.bf16.mxu0 0
        %1097 = vmatpush1.bf16.msra.mxu0 0
        %1098 = vmatprep.subr.bf16.mxu0 0
        %1099 = vmatpush1.bf16.msra.mxu0 0
        %1100 = vmatprep.subr.bf16.mxu0 0
        %1101 = vmatpush1.bf16.msra.mxu0 0
        %1102 = vmatprep.subr.bf16.mxu0 0
        %1103 = vmatpush1.bf16.msra.mxu0 0
        %1104 = vmatprep.subr.bf16.mxu0 0
        %1105 = vmatpush1.bf16.msra.mxu0 0
        %1106 = vmatprep.mubr.bf16.mxu0 0
        %1107 = vmatmul.mubr.bf16.gmra.mrb[0].mxu0 %v1066
        %v1108 = vpop.f32.mrb[0].mxu0
        %v1109 = vadd.f32 %v1059, %v1108
        %v1110 = vpop.f32.mrb[0].mxu0
        %v1111 = vadd.f32 %v1061, %v1110
        %v1112 = vpop.f32.mrb[0].mxu0
        %v1113 = vpop.f32.mrb[0].mxu0
        %1114 = vdwg.mxu0
        %1115 = vrot.lane.b32.xlu0 %v988, 113
        %v1116 = vpop.permute.xlu0 %1115
        %1117 = vrot.lane.b32.xlu0 %v989, 113
        %v1118 = vpop.permute.xlu0 %1117
        %1119 = vrot.lane.b32.xlu0 %v990, 113
        %v1120 = vpop.permute.xlu0 %1119
        %v1121 = vsel %vm538, %v1116, %v1118
        %v1122 = vsel %vm538, %v1118, %v1120
        %v1125 = vsel %vm338, %v1121, 0.0
        %v1126 = vsel %vm339, %v1122, 0.0
        %1127 = vrot.lane.b32.xlu0 %v988, 111
        %v1128 = vpop.permute.xlu0 %1127
        %1129 = vrot.lane.b32.xlu0 %v989, 111
        %v1130 = vpop.permute.xlu0 %1129
        %1131 = vrot.lane.b32.xlu0 %v990, 111
        %v1132 = vpop.permute.xlu0 %1131
        %v1133 = vsel %vm551, %v1128, %v1130
        %v1134 = vsel %vm551, %v1130, %v1132
        %v1137 = vsel %vm358, %v1133, 0.0
        %v1138 = vsel %vm359, %v1134, 0.0
        %1139 = vrot.lane.b32.xlu0 %v988, 112
        %v1140 = vpop.permute.xlu0 %1139
        %1141 = vrot.lane.b32.xlu0 %v989, 112
        %v1142 = vpop.permute.xlu0 %1141
        %1143 = vrot.lane.b32.xlu0 %v990, 112
        %v1144 = vpop.permute.xlu0 %1143
        %v1145 = vsel %vm564, %v1140, %v1142
        %v1146 = vsel %vm564, %v1142, %v1144
        %v1149 = vpack.c.bf16 %v1145, %v1125
        %v1150 = vpack.c.bf16 %v1146, %v1126
        %v1151 = vpack.c.bf16 %v1137, %v1137
        %v1152 = vpack.c.bf16 %v1138, %v1138
        %1153 = vrot.lane.b32.xlu0 %v1012, 80
        %v1154 = vpop.permute.xlu0 %1153
        %v1156 = vsel %vm430, %v1154, 0
        %v1159 = vsel %vm434, %v1151, 0
        %v1162 = vsel %vm434, %v1152, 0
        %1164 = vmatprep.subr.bf16.mxu0 %v1150
        %1165 = vmatpush1.bf16.msra.mxu0 %v1149
        %1166 = vmatprep.subr.bf16.mxu0 %v1162
        %1167 = vmatpush1.bf16.msra.mxu0 %v1159
        %1168 = vmatprep.subr.bf16.mxu0 0
        %1169 = vmatpush1.bf16.msra.mxu0 0
        %1170 = vmatprep.subr.bf16.mxu0 0
        %1171 = vmatpush1.bf16.msra.mxu0 0
        %1172 = vmatprep.subr.bf16.mxu0 0
        %1173 = vmatpush1.bf16.msra.mxu0 0
        %1174 = vmatprep.subr.bf16.mxu0 0
        %1175 = vmatpush1.bf16.msra.mxu0 0
        %1176 = vmatprep.subr.bf16.mxu0 0
        %1177 = vmatpush1.bf16.msra.mxu0 0
        %1178 = vmatprep.subr.bf16.mxu0 0
        %1179 = vmatpush1.bf16.msra.mxu0 0
        %1180 = vmatprep.subr.bf16.mxu0 0
        %1181 = vmatpush1.bf16.msra.mxu0 0
        %1182 = vmatprep.subr.bf16.mxu0 0
        %1183 = vmatpush1.bf16.msra.mxu0 0
        %1184 = vmatprep.subr.bf16.mxu0 0
        %1185 = vmatpush1.bf16.msra.mxu0 0
        %1186 = vmatprep.subr.bf16.mxu0 0
        %1187 = vmatpush1.bf16.msra.mxu0 0
        %1188 = vmatprep.subr.bf16.mxu0 0
        %1189 = vmatpush1.bf16.msra.mxu0 0
        %1190 = vmatprep.subr.bf16.mxu0 0
        %1191 = vmatpush1.bf16.msra.mxu0 0
        %1192 = vmatprep.subr.bf16.mxu0 0
        %1193 = vmatpush1.bf16.msra.mxu0 0
        %1194 = vmatprep.subr.bf16.mxu0 0
        %1195 = vmatpush1.bf16.msra.mxu0 0
        %1196 = vmatprep.mubr.bf16.mxu0 0
        %1197 = vmatmul.mubr.bf16.gmra.mrb[0].mxu0 %v1156
        %v1198 = vpop.f32.mrb[0].mxu0
        %v1199 = vadd.f32 0.0, %v1198
        %v1200 = vpop.f32.mrb[0].mxu0
        %v1201 = vadd.f32 0.0, %v1200
        %v1202 = vpop.f32.mrb[0].mxu0
        %v1203 = vpop.f32.mrb[0].mxu0
        %1204 = vdwg.mxu0
        %v1205 = vadd.f32 %v1109, %v1199
        %v1206 = vadd.f32 %v1111, %v1201
        %v1207 = vld [vmem:[%s6] sm:$0xff]
        %1209 = vset.pattern.permute.xlu0 0
        %1210 = vperm.xlu0 %1209, %v1207
        %v1211 = vpop.permute.xlu0 %1210
        %v1213 = vadd.f32 %v1205, %v1211
        %v1214 = vadd.f32 %v1206, %v1211
        %v1215 = vmul.f32 %v1213, 0.1
        %v1216 = vmul.f32 %v1214, 0.1
        %v1217 = vmax.f32 %v1213, %v1215
        %v1218 = vmax.f32 %v1214, %v1216
        %1219 = vst [vmem:[%s294] sm:$0xff] %v1217
        %1220 = vst [vmem:[%s294 + $0x8] sm:$0xff] %v1218
        %s1221 = sand.u32 %s184, 1
        %s1222 = scalar_lea.sflag [#allocation5], %s1221
        %s1223 = sand.u32 %s184, 1
        %s1224 = smul.addr %s1223, 16
        %s1225 = scalar_lea.vmem [#allocation6], %s1224
        // Predicated region
        $region53: #{tpu_custom_call.1} parent=47 // pred_check
          %p1226 = pneg %p194
        $region54: #{tpu_custom_call.1} parent=47 // pred_check_branch
          %1228 = sbr.rel (%p1226) target = $region56
        $region55: #{tpu_custom_call.1} parent=47 // pred_region
          %s1230 = ssub.s32 256, 256
          %1231 = vsyncadd %s1222, %s1230
          %s1232 = smul.addr %s24, 2
          %s1233 = smul.addr %s1232, 128
          %s1234 = scalar_lea.hbm %s7, %s1233
          %s1236 = sshll.u32 %s1225, 4
          %s1237 = int_to_ptr.vmem [resolvable:$true] %s1236
          %1239 = dma.vmem_to_hbm [thread:$0]  %s1237, 256, %s1234, %s1222
        $region56: #{tpu_custom_call.1} parent=47 // pred_fallthru
          _
      $region48: #{tpu_custom_call.1} parent=5 // pred_fallthru
        _
      %p1240 = scmp.le.s32.totalorder 2, %s19
      // Predicated region
      $region57: #{tpu_custom_call.1} parent=5 // pred_check
        %p1241 = pneg %p1240
      $region58: #{tpu_custom_call.1} parent=5 // pred_check_branch
        %1243 = sbr.rel (%p1241) target = $region60
      $region59: #{tpu_custom_call.1} parent=5 // pred_region
        %s1244 = ssub.s32 %s19, 2
        // Predicated region
        $region61: #{tpu_custom_call.1} parent=59 // pred_check
          %p1245 = pneg %p200
        $region62: #{tpu_custom_call.1} parent=59 // pred_check_branch
          %1247 = sbr.rel (%p1245) target = $region64
        $region63: #{tpu_custom_call.1} parent=59 // pred_region
          %s1248 = sand.u32 %s185, 1
          %s1249 = scalar_lea.sflag [#allocation5], %s1248
          %s1250 = sand.u32 %s185, 1
          %s1251 = smul.addr %s1250, 16
          %s1252 = scalar_lea.vmem [#allocation6], %s1251
          %1253 = dma.done %s1249, 256
        $region64: #{tpu_custom_call.1} parent=59 // pred_fallthru
          _
      $region60: #{tpu_custom_call.1} parent=5 // pred_fallthru
        _
    $region6: #{tpu_custom_call.1} parent=1 // loop_footer
      %s23 = sadd.s32 1, %s19
    $region7: #{tpu_custom_call.1} parent=1 // loop_footer_branch
      %18 = sbr.rel target = $region3
    $region8: #{tpu_custom_call.1} parent=1 // loop_exit
      _
    %1254 = vsyncpa [#allocation4], 1
    %s1255 = scalar_lea.sflag [#allocation4], 1
    %1256 = vsyncpa %s1255, 1
    %1257 = vsyncpa [#allocation5], 1
    %s1258 = scalar_lea.sflag [#allocation5], 1
    %1259 = vsyncpa %s1258, 1

</llo_original>
